<compile_context>
chip_gen: v6e
topology: v6e:2x2x1
jax: 0.10.0
libtpu: 0.0.40
codegen_flags: <defaults>
</compile_context>

<pallas_src>
import functools

import jax
import jax.numpy as jnp
from jax.experimental import pallas as pl
from jax.experimental.pallas import tpu as pltpu


# ---------------------------------------------------------------------------
# Helpers
# ---------------------------------------------------------------------------

def _pick_row_tile(h_out, stride, width, chans, cap=None):
    """Output-row tile size: largest tile whose padded hidden scratch fits a
    conservative (v7x-safe) VMEM budget, capped at 64 rows."""
    if cap is None:
        budget = 4 * 1024 * 1024                      # bytes for the scratch
        rows = budget // (4 * (width + 2) * max(chans, 1))
        cap = max(1, min(64, (rows - 2) // max(stride, 1)))
    return max(1, min(h_out, cap))


def _col_select(w_out, w_dense, stride):
    """(w_out, w_dense) 0/1 matrix selecting every `stride`-th dense column."""
    rows = jax.lax.broadcasted_iota(jnp.int32, (w_out, w_dense), 0)
    cols = jax.lax.broadcasted_iota(jnp.int32, (w_out, w_dense), 1)
    return (cols == stride * rows).astype(jnp.float32)


# ---------------------------------------------------------------------------
# Fused InvertedResidual kernel
# ---------------------------------------------------------------------------

def _ir_kernel(*refs, stride, th, th_out, w, w_out, h,
               has_expand, has_dn, has_res):
    """[1x1 expand+ReLU] -> 3x3 depthwise+ReLU (stride) -> 1x1 project
    [+ fused residual] for one (image, output-row-tile) grid cell.  The
    expanded hidden never leaves VMEM (hid_pad scratch, zero-padded in W;
    H halo rows supplied by the x_up / x_dn single-row blocks)."""
    it = iter(refs)
    x_up_ref = next(it)
    x_mid_ref = next(it)
    x_dn_ref = next(it) if has_dn else None
    if has_expand:
        exp_w_ref = next(it)
        exp_b_ref = next(it)
    dw_w_ref = next(it)
    dw_b_ref = next(it)
    proj_w_ref = next(it)
    proj_b_ref = next(it)
    out_ref = next(it)
    hid_pad = next(it)                       # (thp, w + 2, hid) VMEM scratch

    s = stride
    j = pl.program_id(1)
    hid = hid_pad.shape[-1]
    thp = hid_pad.shape[0]
    zero_row = jnp.zeros((w, hid), jnp.float32)

    def expand_row(x_row):
        x_row = x_row.astype(jnp.float32)
        if not has_expand:
            return x_row
        v = jnp.dot(x_row, exp_w_ref[...], preferred_element_type=jnp.float32)
        return jnp.maximum(v + exp_b_ref[...], 0.0)

    # Zero the left / right padding columns of the hidden scratch.
    hid_pad[:, 0:1, :] = jnp.zeros((thp, 1, hid), jnp.float32)
    hid_pad[:, w + 1:w + 2, :] = jnp.zeros((thp, 1, hid), jnp.float32)

    # Top halo row (zero when it falls on the conv's zero padding).
    up = expand_row(x_up_ref[0, 0])
    hid_pad[0, 1:w + 1, :] = jnp.where(j * th - 1 >= 0, up, zero_row)

    # Main input rows of this tile (masked past the true image height).
    def fill_row(r, carry):
        row = expand_row(x_mid_ref[0, r])
        hid_pad[1 + r, 1:w + 1, :] = jnp.where(j * th + r < h, row, zero_row)
        return carry
    jax.lax.fori_loop(0, th, fill_row, 0)

    # Bottom halo row (stride-1 layers only).
    if has_dn:
        dn = expand_row(x_dn_ref[0, 0])
        hid_pad[th + 1, 1:w + 1, :] = jnp.where(j * th + th < h, dn, zero_row)

    col_sel = None if s == 1 else _col_select(w_out, w, s)
    wd_dense = w_out if s == 1 else w        # dense column count per tap

    # Depthwise 3x3 + ReLU, 1x1 project (+ fused residual), one output row at
    # a time.  All tap reads are unit-stride slices of the VMEM hidden.
    def out_row(t, carry):
        base = s * t
        acc = jnp.zeros((wd_dense, hid), jnp.float32)
        for dy in range(3):
            for dx in range(3):
                k = dy * 3 + dx
                tap = hid_pad[base + dy, dx:dx + wd_dense, :]
                acc = acc + tap * dw_w_ref[k:k + 1, :]
        acc = jnp.maximum(acc + dw_b_ref[...], 0.0)
        if col_sel is not None:              # stride-2 column subsample (MXU)
            acc = jnp.dot(col_sel, acc, preferred_element_type=jnp.float32)
        o = jnp.dot(acc, proj_w_ref[...], preferred_element_type=jnp.float32)
        o = o + proj_b_ref[...]
        if has_res:
            o = o + x_mid_ref[0, t].astype(jnp.float32)
        out_ref[0, t] = o.astype(out_ref.dtype)
        return carry
    jax.lax.fori_loop(0, th_out, out_row, 0)


def fused_inverted_residual(x, lp, cfg, row_tile_cap=None):
    """One InvertedResidual block as a single pallas_call.  x: (N, H, W, Cin)."""
    expand, out_c, stride = cfg
    n, h, w, cin = x.shape
    hid = cin * expand
    h_out = (h - 1) // stride + 1
    w_out = (w - 1) // stride + 1
    has_expand = expand != 1
    has_dn = stride == 1
    has_res = stride == 1 and cin == out_c

    th_out = _pick_row_tile(h_out, stride, w, hid, row_tile_cap)
    th = th_out * stride
    thp = th + 3 - stride
    nj = pl.cdiv(h_out, th_out)

    in_specs = [
        pl.BlockSpec((1, 1, w, cin),
                     lambda b, j: (b, jnp.maximum(j * th - 1, 0), 0, 0)),
        pl.BlockSpec((1, th, w, cin), lambda b, j: (b, j, 0, 0)),
    ]
    args = [x, x]
    if has_dn:
        in_specs.append(
            pl.BlockSpec((1, 1, w, cin),
                         lambda b, j: (b, jnp.minimum(j * th + th, h - 1), 0, 0)))
        args.append(x)
    if has_expand:
        in_specs += [pl.BlockSpec((cin, hid), lambda b, j: (0, 0)),
                     pl.BlockSpec((1, hid), lambda b, j: (0, 0))]
        args += [lp["exp_w"], lp["exp_b"].reshape(1, hid)]
    in_specs += [pl.BlockSpec((9, hid), lambda b, j: (0, 0)),
                 pl.BlockSpec((1, hid), lambda b, j: (0, 0)),
                 pl.BlockSpec((hid, out_c), lambda b, j: (0, 0)),
                 pl.BlockSpec((1, out_c), lambda b, j: (0, 0))]
    args += [lp["dw_w"], lp["dw_b"].reshape(1, hid),
             lp["proj_w"], lp["proj_b"].reshape(1, out_c)]

    flops = (2 * n * h * w * cin * hid * (1 if has_expand else 0)
             + 2 * 9 * n * h_out * w_out * hid
             + 2 * n * h_out * w_out * hid * out_c)
    bytes_acc = 4 * (2 * n * h * w * cin + n * h_out * w_out * out_c
                     + cin * hid + 11 * hid + hid * out_c + out_c)

    return pl.pallas_call(
        functools.partial(_ir_kernel, stride=stride, th=th, th_out=th_out,
                          w=w, w_out=w_out, h=h, has_expand=has_expand,
                          has_dn=has_dn, has_res=has_res),
        grid=(n, nj),
        out_shape=jax.ShapeDtypeStruct((n, h_out, w_out, out_c), jnp.float32),
        in_specs=in_specs,
        out_specs=pl.BlockSpec((1, th_out, w_out, out_c),
                               lambda b, j: (b, j, 0, 0)),
        scratch_shapes=[pltpu.VMEM((thp, w + 2, hid), jnp.float32)],
        compiler_params=pltpu.CompilerParams(
            dimension_semantics=("parallel", "parallel")),
        cost_estimate=pl.CostEstimate(flops=int(flops), transcendentals=0,
                                      bytes_accessed=int(bytes_acc)),
    )(*args)


# ---------------------------------------------------------------------------
# Stem: Conv3x3(stride) + folded-BN bias + ReLU
# ---------------------------------------------------------------------------

def _stem_kernel(*refs, stride, th, th_out, w, w_out, h, has_dn):
    """Full 3x3 conv for one (image, output-row-tile) cell.  Each tap is a
    K=Cin MXU matmul (no per-channel lane broadcasts)."""
    it = iter(refs)
    x_up_ref = next(it)
    x_mid_ref = next(it)
    x_dn_ref = next(it) if has_dn else None
    w_ref = next(it)                         # (9, cin, cout)
    b_ref = next(it)                         # (1, cout)
    out_ref = next(it)
    xpad = next(it)                          # (thp, w + 2, cin) VMEM scratch

    s = stride
    j = pl.program_id(1)
    cin = xpad.shape[-1]
    cout = out_ref.shape[-1]
    thp = xpad.shape[0]
    zero_row = jnp.zeros((w, cin), jnp.float32)

    xpad[:, 0:1, :] = jnp.zeros((thp, 1, cin), jnp.float32)
    xpad[:, w + 1:w + 2, :] = jnp.zeros((thp, 1, cin), jnp.float32)

    up = x_up_ref[0, 0].astype(jnp.float32)
    xpad[0, 1:w + 1, :] = jnp.where(j * th - 1 >= 0, up, zero_row)

    def fill_row(r, carry):
        row = x_mid_ref[0, r].astype(jnp.float32)
        xpad[1 + r, 1:w + 1, :] = jnp.where(j * th + r < h, row, zero_row)
        return carry
    jax.lax.fori_loop(0, th, fill_row, 0)

    if has_dn:
        dn = x_dn_ref[0, 0].astype(jnp.float32)
        xpad[th + 1, 1:w + 1, :] = jnp.where(j * th + th < h, dn, zero_row)

    col_sel = None if s == 1 else _col_select(w_out, w, s)
    wd_dense = w_out if s == 1 else w

    def out_row(t, carry):
        base = s * t
        acc = jnp.zeros((wd_dense, cout), jnp.float32)
        for dy in range(3):
            for dx in range(3):
                k = dy * 3 + dx
                tap = xpad[base + dy, dx:dx + wd_dense, :]
                acc = acc + jnp.dot(tap, w_ref[k],
                                    preferred_element_type=jnp.float32)
        acc = jnp.maximum(acc + b_ref[...], 0.0)
        if col_sel is not None:
            acc = jnp.dot(col_sel, acc, preferred_element_type=jnp.float32)
        out_ref[0, t] = acc.astype(out_ref.dtype)
        return carry
    jax.lax.fori_loop(0, th_out, out_row, 0)


def stem_conv(x, w9, b, stride=2, row_tile_cap=None):
    """Stem conv.  x: (N, H, W, Cin) NHWC, w9: (9, Cin, Cout)."""
    n, h, wd, cin = x.shape
    cout = w9.shape[-1]
    h_out = (h - 1) // stride + 1
    w_out = (wd - 1) // stride + 1
    has_dn = stride == 1

    th_out = _pick_row_tile(h_out, stride, wd, cin, row_tile_cap)
    th = th_out * stride
    thp = th + 3 - stride
    nj = pl.cdiv(h_out, th_out)

    in_specs = [
        pl.BlockSpec((1, 1, wd, cin),
                     lambda b_, j: (b_, jnp.maximum(j * th - 1, 0), 0, 0)),
        pl.BlockSpec((1, th, wd, cin), lambda b_, j: (b_, j, 0, 0)),
    ]
    args = [x, x]
    if has_dn:
        in_specs.append(
            pl.BlockSpec((1, 1, wd, cin),
                         lambda b_, j: (b_, jnp.minimum(j * th + th, h - 1), 0, 0)))
        args.append(x)
    in_specs += [pl.BlockSpec((9, cin, cout), lambda b_, j: (0, 0, 0)),
                 pl.BlockSpec((1, cout), lambda b_, j: (0, 0))]
    args += [w9, b.reshape(1, cout)]

    flops = 2 * 9 * n * h_out * w_out * cin * cout
    bytes_acc = 4 * (n * h * wd * cin + n * h_out * w_out * cout
                     + 9 * cin * cout + cout)

    return pl.pallas_call(
        functools.partial(_stem_kernel, stride=stride, th=th, th_out=th_out,
                          w=wd, w_out=w_out, h=h, has_dn=has_dn),
        grid=(n, nj),
        out_shape=jax.ShapeDtypeStruct((n, h_out, w_out, cout), jnp.float32),
        in_specs=in_specs,
        out_specs=pl.BlockSpec((1, th_out, w_out, cout),
                               lambda b_, j: (b_, j, 0, 0)),
        scratch_shapes=[pltpu.VMEM((thp, wd + 2, cin), jnp.float32)],
        compiler_params=pltpu.CompilerParams(
            dimension_semantics=("parallel", "parallel")),
        cost_estimate=pl.CostEstimate(flops=int(flops), transcendentals=0,
                                      bytes_accessed=int(bytes_acc)),
    )(*args)


# ---------------------------------------------------------------------------
# Module orchestration (exact StaticTokenPyramidModule.forward semantics)
# ---------------------------------------------------------------------------

def static_token_pyramid_forward(x_nchw, params, cfgs, embed_out_indice,
                                 runtime_depth, row_tile_cap=None):
    x = jnp.transpose(x_nchw, (0, 2, 3, 1))                # NCHW -> NHWC
    x = stem_conv(x, params["stem_w"], params["stem_b"], stride=2,
                  row_tile_cap=row_tile_cap)

    sum_val, return_block_id = 0, []
    for i in range(len(runtime_depth)):
        sum_val += runtime_depth[i]
        if i in embed_out_indice:
            return_block_id.append(sum_val)

    outs = []
    for i, (lp, cfg) in enumerate(zip(params["layers"], cfgs)):
        x = fused_inverted_residual(x, lp, cfg, row_tile_cap=row_tile_cap)
        if i + 1 in return_block_id:
            outs.append(jnp.transpose(x, (0, 3, 1, 2)))    # back to NCHW
    return outs


def init_params(key, cfgs, in_ch, stem_ch):
    def nrm(k, shape):
        return 0.1 * jax.random.normal(k, shape, jnp.float32)

    params = {}
    key, k = jax.random.split(key)
    params["stem_w"] = nrm(k, (9, in_ch, stem_ch))         # (ky*kx, cin, cout)
    key, k = jax.random.split(key)
    params["stem_b"] = nrm(k, (stem_ch,))                  # folded-BN bias

    layers = []
    c = stem_ch
    for (expand, out_c, _stride) in cfgs:
        hid = c * expand
        lp = {}
        if expand != 1:
            key, k = jax.random.split(key)
            lp["exp_w"] = nrm(k, (c, hid))
            key, k = jax.random.split(key)
            lp["exp_b"] = nrm(k, (hid,))
        key, k = jax.random.split(key)
        lp["dw_w"] = nrm(k, (9, hid))
        key, k = jax.random.split(key)
        lp["dw_b"] = nrm(k, (hid,))
        key, k = jax.random.split(key)
        lp["proj_w"] = nrm(k, (hid, out_c))
        key, k = jax.random.split(key)
        lp["proj_b"] = nrm(k, (out_c,))
        layers.append(lp)
        c = out_c
    params["layers"] = layers
    return params


# ---------------------------------------------------------------------------
# Pure-JAX reference (ground truth for the numerics check)
# ---------------------------------------------------------------------------

def _ref_forward(x_nchw, params, cfgs, embed_out_indice, runtime_depth):
    dn = ("NHWC", "HWIO", "NHWC")
    hi = jax.lax.Precision.HIGHEST

    def conv(x, w, stride, groups=1):
        return jax.lax.conv_general_dilated(
            x, w, (stride, stride), [(1, 1), (1, 1)],
            dimension_numbers=dn, feature_group_count=groups, precision=hi)

    x = jnp.transpose(x_nchw, (0, 2, 3, 1))
    sw = params["stem_w"].reshape(3, 3, params["stem_w"].shape[1], -1)
    x = jnp.maximum(conv(x, sw, 2) + params["stem_b"], 0.0)

    sum_val, return_block_id = 0, []
    for i in range(len(runtime_depth)):
        sum_val += runtime_depth[i]
        if i in embed_out_indice:
            return_block_id.append(sum_val)

    outs = []
    for i, (lp, cfg) in enumerate(zip(params["layers"], cfgs)):
        expand, out_c, stride = cfg
        in_c = x.shape[-1]
        h = x
        if expand != 1:
            h = jnp.maximum(
                jnp.einsum("nhwc,cd->nhwd", h, lp["exp_w"],
                           precision=hi) + lp["exp_b"], 0.0)
        c = h.shape[-1]
        h = jnp.maximum(
            conv(h, lp["dw_w"].reshape(3, 3, 1, c), stride, groups=c)
            + lp["dw_b"], 0.0)
        h = jnp.einsum("nhwc,cd->nhwd", h, lp["proj_w"],
                       precision=hi) + lp["proj_b"]
        if stride == 1 and in_c == out_c:
            h = h + x
        x = h
        if i + 1 in return_block_id:
            outs.append(jnp.transpose(x, (0, 3, 1, 2)))
    return outs


if __name__ == "__main__":
    # Small deterministic instantiation (TopFormer-like, scaled down).
    cfgs = [  # (expand_ratio, out_channels, stride)
        (1, 8, 1),
        (2, 16, 2),
        (2, 16, 1),
        (2, 32, 2),
    ]
    embed_out_indice = [0, 2]
    runtime_depth = [1, 1, 2]   # -> return_block_id = [1, 4]

    key = jax.random.PRNGKey(0)
    pkey, xkey = jax.random.split(key)
    params = init_params(pkey, cfgs, in_ch=3, stem_ch=8)

    x = jax.random.normal(xkey, (2, 3, 16, 16), dtype=jnp.float32)  # NCHW

    # row_tile_cap=4 forces multi-tile rows on the larger feature maps so the
    # halo / boundary-mask paths are exercised by the numerics check.
    outs = static_token_pyramid_forward(x, params, cfgs, embed_out_indice,
                                        runtime_depth, row_tile_cap=4)
    outs = jax.block_until_ready(outs)

    # Expected pyramid outputs (NCHW).
    assert len(outs) == 2
    assert outs[0].shape == (2, 8, 8, 8)
    assert outs[1].shape == (2, 32, 2, 2)

    # Numerics vs. plain-JAX reference.
    refs = _ref_forward(x, params, cfgs, embed_out_indice, runtime_depth)
    for o, r in zip(outs, refs):
        err = float(jnp.max(jnp.abs(o - r)))
        scale = float(jnp.max(jnp.abs(r))) + 1e-6
        assert err <= 1e-2 + 1e-2 * scale, f"mismatch: {err} (scale {scale})"

    print("KERNEL_OK")
</pallas_src>

<mosaic_0001>
module attributes {stable_mosaic.version = 11 : i64} {
  func.func @_stem_kernel(%arg0: i32, %arg1: i32, %arg2: memref<1x1x16x3xf32, #tpu.memory_space<vmem>>, %arg3: memref<1x8x16x3xf32, #tpu.memory_space<vmem>>, %arg4: memref<9x3x8xf32, #tpu.memory_space<vmem>>, %arg5: memref<1x8xf32, #tpu.memory_space<vmem>>, %arg6: memref<1x4x8x8xf32, #tpu.memory_space<vmem>>, %arg7: memref<9x18x3xf32, #tpu.memory_space<vmem>>) attributes {dimension_semantics = [#tpu.dimension_semantics<parallel>, #tpu.dimension_semantics<parallel>], iteration_bounds = array<i64: 2, 2>, scalar_prefetch = 0 : i64, scratch_operands = 1 : i64, tpu.core_type = #tpu.core_type<tc>, window_params = [{transform_indices = @transform_0, window_bounds = array<i64: 1, 1, 16, 3>}, {transform_indices = @transform_1, window_bounds = array<i64: 1, 8, 16, 3>}, {pipeline_mode = #tpu.pipeline_mode<synchronous>, transform_indices = @transform_2, window_bounds = array<i64: 9, 3, 8>}, {pipeline_mode = #tpu.pipeline_mode<synchronous>, transform_indices = @transform_3, window_bounds = array<i64: 1, 8>}, {transform_indices = @transform_4, window_bounds = array<i64: 1, 4, 8, 8>}]} {
    %cst = arith.constant 0.000000e+00 : f32
    %0 = vector.broadcast %cst : f32 to vector<16x3xf32>
    %cst_0 = arith.constant 0.000000e+00 : f32
    %1 = vector.broadcast %cst_0 : f32 to vector<9x1x3xf32>
    %c0 = arith.constant 0 : index
    %c0_1 = arith.constant 0 : index
    %c0_2 = arith.constant 0 : index
    %2 = vector.load %arg7[%c0, %c0_1, %c0_2] : memref<9x18x3xf32, #tpu.memory_space<vmem>>, vector<9x1x3xf32>
    tpu.vector_store %arg7[%c0, %c0_1, %c0_2], %1 {strides = array<i32>} : memref<9x18x3xf32, #tpu.memory_space<vmem>>, vector<9x1x3xf32>,
    %cst_3 = arith.constant 0.000000e+00 : f32
    %3 = vector.broadcast %cst_3 : f32 to vector<9x1x3xf32>
    %c0_4 = arith.constant 0 : index
    %c17 = arith.constant 17 : index
    %c0_5 = arith.constant 0 : index
    %4 = vector.load %arg7[%c0_4, %c17, %c0_5] : memref<9x18x3xf32, #tpu.memory_space<vmem>>, vector<9x1x3xf32>
    tpu.vector_store %arg7[%c0_4, %c17, %c0_5], %3 {strides = array<i32>} : memref<9x18x3xf32, #tpu.memory_space<vmem>>, vector<9x1x3xf32>,
    %c0_6 = arith.constant 0 : index
    %c0_7 = arith.constant 0 : index
    %c0_8 = arith.constant 0 : index
    %c0_9 = arith.constant 0 : index
    %5 = vector.load %arg2[%c0_6, %c0_7, %c0_8, %c0_9] : memref<1x1x16x3xf32, #tpu.memory_space<vmem>>, vector<1x1x16x3xf32>
    %6 = vector.shape_cast %5 : vector<1x1x16x3xf32> to vector<16x3xf32>
    %c8_i32 = arith.constant 8 : i32
    %7 = arith.muli %arg1, %c8_i32 : i32
    %c1_i32 = arith.constant 1 : i32
    %8 = arith.subi %7, %c1_i32 : i32
    %c0_i32 = arith.constant 0 : i32
    %9 = arith.cmpi sge, %8, %c0_i32 : i32
    %10 = arith.select %9, %6, %0 : vector<16x3xf32>
    %c0_10 = arith.constant 0 : index
    %c1 = arith.constant 1 : index
    %c0_11 = arith.constant 0 : index
    %11 = vector.load %arg7[%c0_10, %c1, %c0_11] : memref<9x18x3xf32, #tpu.memory_space<vmem>>, vector<1x16x3xf32>
    %12 = vector.shape_cast %11 : vector<1x16x3xf32> to vector<16x3xf32>
    %13 = vector.shape_cast %10 : vector<16x3xf32> to vector<1x16x3xf32>
    tpu.vector_store %arg7[%c0_10, %c1, %c0_11], %13 {strides = array<i32>} : memref<9x18x3xf32, #tpu.memory_space<vmem>>, vector<1x16x3xf32>,
    %c0_i32_12 = arith.constant 0 : i32
    %c8_i32_13 = arith.constant 8 : i32
    %14 = arith.addi %c0_i32_12, %c8_i32_13 : i32
    %c1_i32_14 = arith.constant 1 : i32
    scf.for %arg8 = %c0_i32_12 to %14 step %c1_i32_14  : i32 {
      %c0_19 = arith.constant 0 : index
      %23 = arith.index_cast %arg8 : i32 to index
      %c0_20 = arith.constant 0 : index
      %c0_21 = arith.constant 0 : index
      %24 = vector.load %arg3[%c0_19, %23, %c0_20, %c0_21] : memref<1x8x16x3xf32, #tpu.memory_space<vmem>>, vector<1x1x16x3xf32>
      %25 = vector.shape_cast %24 : vector<1x1x16x3xf32> to vector<16x3xf32>
      %c8_i32_22 = arith.constant 8 : i32
      %26 = arith.muli %arg1, %c8_i32_22 : i32
      %27 = arith.addi %26, %arg8 : i32
      %c16_i32 = arith.constant 16 : i32
      %28 = arith.cmpi slt, %27, %c16_i32 : i32
      %29 = arith.select %28, %25, %0 : vector<16x3xf32>
      %c1_i32_23 = arith.constant 1 : i32
      %30 = arith.addi %c1_i32_23, %arg8 : i32
      %31 = arith.index_cast %30 : i32 to index
      %c1_24 = arith.constant 1 : index
      %c0_25 = arith.constant 0 : index
      %32 = vector.load %arg7[%31, %c1_24, %c0_25] : memref<9x18x3xf32, #tpu.memory_space<vmem>>, vector<1x16x3xf32>
      %33 = vector.shape_cast %32 : vector<1x16x3xf32> to vector<16x3xf32>
      %34 = vector.shape_cast %29 : vector<16x3xf32> to vector<1x16x3xf32>
      tpu.vector_store %arg7[%31, %c1_24, %c0_25], %34 {strides = array<i32>} : memref<9x18x3xf32, #tpu.memory_space<vmem>>, vector<1x16x3xf32>,
    }
    %c8_i32_15 = arith.constant 8 : i32
    %15 = tpu.iota {dimensions = array<i32: 0>} : vector<8x16xi32>
    %16 = tpu.iota {dimensions = array<i32: 1>} : vector<8x16xi32>
    %c2_i32 = arith.constant 2 : i32
    %17 = vector.broadcast %c2_i32 : i32 to vector<8x16xi32>
    %18 = arith.muli %17, %15 : vector<8x16xi32>
    %19 = arith.cmpi eq, %16, %18 : vector<8x16xi32>
    %20 = arith.extui %19 : vector<8x16xi1> to vector<8x16xi32>
    %21 = arith.sitofp %20 : vector<8x16xi32> to vector<8x16xf32>
    %c0_i32_16 = arith.constant 0 : i32
    %c4_i32 = arith.constant 4 : i32
    %22 = arith.addi %c0_i32_16, %c4_i32 : i32
    %c1_i32_17 = arith.constant 1 : i32
    scf.for %arg8 = %c0_i32_16 to %22 step %c1_i32_17  : i32 {
      %c2_i32_19 = arith.constant 2 : i32
      %23 = arith.muli %c2_i32_19, %arg8 : i32
      %cst_20 = arith.constant 0.000000e+00 : f32
      %24 = vector.broadcast %cst_20 : f32 to vector<16x8xf32>
      %c0_i32_21 = arith.constant 0 : i32
      %25 = arith.addi %23, %c0_i32_21 : i32
      %26 = arith.index_cast %25 : i32 to index
      %c0_22 = arith.constant 0 : index
      %c0_23 = arith.constant 0 : index
      %27 = vector.load %arg7[%26, %c0_22, %c0_23] : memref<9x18x3xf32, #tpu.memory_space<vmem>>, vector<1x16x3xf32>
      %28 = vector.shape_cast %27 : vector<1x16x3xf32> to vector<16x3xf32>
      %c0_24 = arith.constant 0 : index
      %c0_25 = arith.constant 0 : index
      %c0_26 = arith.constant 0 : index
      %29 = vector.load %arg4[%c0_24, %c0_25, %c0_26] : memref<9x3x8xf32, #tpu.memory_space<vmem>>, vector<1x3x8xf32>
      %30 = vector.shape_cast %29 : vector<1x3x8xf32> to vector<3x8xf32>
      %cst_27 = arith.constant dense<0.000000e+00> : vector<16x8xf32>
      %31 = tpu.matmul %28, %30, %cst_27 {dimension_numbers = #tpu.dot_dimension_numbers<[1], [0], [0], [1], [0, 0, 1, 1], [], []>} : vector<16x3xf32>, vector<3x8xf32>, vector<16x8xf32> -> vector<16x8xf32>
      %32 = arith.addf %24, %31 : vector<16x8xf32>
      %c0_i32_28 = arith.constant 0 : i32
      %33 = arith.addi %23, %c0_i32_28 : i32
      %34 = arith.index_cast %33 : i32 to index
      %c1_29 = arith.constant 1 : index
      %c0_30 = arith.constant 0 : index
      %35 = vector.load %arg7[%34, %c1_29, %c0_30] : memref<9x18x3xf32, #tpu.memory_space<vmem>>, vector<1x16x3xf32>
      %36 = vector.shape_cast %35 : vector<1x16x3xf32> to vector<16x3xf32>
      %c1_31 = arith.constant 1 : index
      %c0_32 = arith.constant 0 : index
      %c0_33 = arith.constant 0 : index
      %37 = vector.load %arg4[%c1_31, %c0_32, %c0_33] : memref<9x3x8xf32, #tpu.memory_space<vmem>>, vector<1x3x8xf32>
      %38 = vector.shape_cast %37 : vector<1x3x8xf32> to vector<3x8xf32>
      %cst_34 = arith.constant dense<0.000000e+00> : vector<16x8xf32>
      %39 = tpu.matmul %36, %38, %cst_34 {dimension_numbers = #tpu.dot_dimension_numbers<[1], [0], [0], [1], [0, 0, 1, 1], [], []>} : vector<16x3xf32>, vector<3x8xf32>, vector<16x8xf32> -> vector<16x8xf32>
      %40 = arith.addf %32, %39 : vector<16x8xf32>
      %c0_i32_35 = arith.constant 0 : i32
      %41 = arith.addi %23, %c0_i32_35 : i32
      %42 = arith.index_cast %41 : i32 to index
      %c2 = arith.constant 2 : index
      %c0_36 = arith.constant 0 : index
      %43 = vector.load %arg7[%42, %c2, %c0_36] : memref<9x18x3xf32, #tpu.memory_space<vmem>>, vector<1x16x3xf32>
      %44 = vector.shape_cast %43 : vector<1x16x3xf32> to vector<16x3xf32>
      %c2_37 = arith.constant 2 : index
      %c0_38 = arith.constant 0 : index
      %c0_39 = arith.constant 0 : index
      %45 = vector.load %arg4[%c2_37, %c0_38, %c0_39] : memref<9x3x8xf32, #tpu.memory_space<vmem>>, vector<1x3x8xf32>
      %46 = vector.shape_cast %45 : vector<1x3x8xf32> to vector<3x8xf32>
      %cst_40 = arith.constant dense<0.000000e+00> : vector<16x8xf32>
      %47 = tpu.matmul %44, %46, %cst_40 {dimension_numbers = #tpu.dot_dimension_numbers<[1], [0], [0], [1], [0, 0, 1, 1], [], []>} : vector<16x3xf32>, vector<3x8xf32>, vector<16x8xf32> -> vector<16x8xf32>
      %48 = arith.addf %40, %47 : vector<16x8xf32>
      %c1_i32_41 = arith.constant 1 : i32
      %49 = arith.addi %23, %c1_i32_41 : i32
      %50 = arith.index_cast %49 : i32 to index
      %c0_42 = arith.constant 0 : index
      %c0_43 = arith.constant 0 : index
      %51 = vector.load %arg7[%50, %c0_42, %c0_43] : memref<9x18x3xf32, #tpu.memory_space<vmem>>, vector<1x16x3xf32>
      %52 = vector.shape_cast %51 : vector<1x16x3xf32> to vector<16x3xf32>
      %c3 = arith.constant 3 : index
      %c0_44 = arith.constant 0 : index
      %c0_45 = arith.constant 0 : index
      %53 = vector.load %arg4[%c3, %c0_44, %c0_45] : memref<9x3x8xf32, #tpu.memory_space<vmem>>, vector<1x3x8xf32>
      %54 = vector.shape_cast %53 : vector<1x3x8xf32> to vector<3x8xf32>
      %cst_46 = arith.constant dense<0.000000e+00> : vector<16x8xf32>
      %55 = tpu.matmul %52, %54, %cst_46 {dimension_numbers = #tpu.dot_dimension_numbers<[1], [0], [0], [1], [0, 0, 1, 1], [], []>} : vector<16x3xf32>, vector<3x8xf32>, vector<16x8xf32> -> vector<16x8xf32>
      %56 = arith.addf %48, %55 : vector<16x8xf32>
      %c1_i32_47 = arith.constant 1 : i32
      %57 = arith.addi %23, %c1_i32_47 : i32
      %58 = arith.index_cast %57 : i32 to index
      %c1_48 = arith.constant 1 : index
      %c0_49 = arith.constant 0 : index
      %59 = vector.load %arg7[%58, %c1_48, %c0_49] : memref<9x18x3xf32, #tpu.memory_space<vmem>>, vector<1x16x3xf32>
      %60 = vector.shape_cast %59 : vector<1x16x3xf32> to vector<16x3xf32>
      %c4 = arith.constant 4 : index
      %c0_50 = arith.constant 0 : index
      %c0_51 = arith.constant 0 : index
      %61 = vector.load %arg4[%c4, %c0_50, %c0_51] : memref<9x3x8xf32, #tpu.memory_space<vmem>>, vector<1x3x8xf32>
      %62 = vector.shape_cast %61 : vector<1x3x8xf32> to vector<3x8xf32>
      %cst_52 = arith.constant dense<0.000000e+00> : vector<16x8xf32>
      %63 = tpu.matmul %60, %62, %cst_52 {dimension_numbers = #tpu.dot_dimension_numbers<[1], [0], [0], [1], [0, 0, 1, 1], [], []>} : vector<16x3xf32>, vector<3x8xf32>, vector<16x8xf32> -> vector<16x8xf32>
      %64 = arith.addf %56, %63 : vector<16x8xf32>
      %c1_i32_53 = arith.constant 1 : i32
      %65 = arith.addi %23, %c1_i32_53 : i32
      %66 = arith.index_cast %65 : i32 to index
      %c2_54 = arith.constant 2 : index
      %c0_55 = arith.constant 0 : index
      %67 = vector.load %arg7[%66, %c2_54, %c0_55] : memref<9x18x3xf32, #tpu.memory_space<vmem>>, vector<1x16x3xf32>
      %68 = vector.shape_cast %67 : vector<1x16x3xf32> to vector<16x3xf32>
      %c5 = arith.constant 5 : index
      %c0_56 = arith.constant 0 : index
      %c0_57 = arith.constant 0 : index
      %69 = vector.load %arg4[%c5, %c0_56, %c0_57] : memref<9x3x8xf32, #tpu.memory_space<vmem>>, vector<1x3x8xf32>
      %70 = vector.shape_cast %69 : vector<1x3x8xf32> to vector<3x8xf32>
      %cst_58 = arith.constant dense<0.000000e+00> : vector<16x8xf32>
      %71 = tpu.matmul %68, %70, %cst_58 {dimension_numbers = #tpu.dot_dimension_numbers<[1], [0], [0], [1], [0, 0, 1, 1], [], []>} : vector<16x3xf32>, vector<3x8xf32>, vector<16x8xf32> -> vector<16x8xf32>
      %72 = arith.addf %64, %71 : vector<16x8xf32>
      %c2_i32_59 = arith.constant 2 : i32
      %73 = arith.addi %23, %c2_i32_59 : i32
      %74 = arith.index_cast %73 : i32 to index
      %c0_60 = arith.constant 0 : index
      %c0_61 = arith.constant 0 : index
      %75 = vector.load %arg7[%74, %c0_60, %c0_61] : memref<9x18x3xf32, #tpu.memory_space<vmem>>, vector<1x16x3xf32>
      %76 = vector.shape_cast %75 : vector<1x16x3xf32> to vector<16x3xf32>
      %c6 = arith.constant 6 : index
      %c0_62 = arith.constant 0 : index
      %c0_63 = arith.constant 0 : index
      %77 = vector.load %arg4[%c6, %c0_62, %c0_63] : memref<9x3x8xf32, #tpu.memory_space<vmem>>, vector<1x3x8xf32>
      %78 = vector.shape_cast %77 : vector<1x3x8xf32> to vector<3x8xf32>
      %cst_64 = arith.constant dense<0.000000e+00> : vector<16x8xf32>
      %79 = tpu.matmul %76, %78, %cst_64 {dimension_numbers = #tpu.dot_dimension_numbers<[1], [0], [0], [1], [0, 0, 1, 1], [], []>} : vector<16x3xf32>, vector<3x8xf32>, vector<16x8xf32> -> vector<16x8xf32>
      %80 = arith.addf %72, %79 : vector<16x8xf32>
      %c2_i32_65 = arith.constant 2 : i32
      %81 = arith.addi %23, %c2_i32_65 : i32
      %82 = arith.index_cast %81 : i32 to index
      %c1_66 = arith.constant 1 : index
      %c0_67 = arith.constant 0 : index
      %83 = vector.load %arg7[%82, %c1_66, %c0_67] : memref<9x18x3xf32, #tpu.memory_space<vmem>>, vector<1x16x3xf32>
      %84 = vector.shape_cast %83 : vector<1x16x3xf32> to vector<16x3xf32>
      %c7 = arith.constant 7 : index
      %c0_68 = arith.constant 0 : index
      %c0_69 = arith.constant 0 : index
      %85 = vector.load %arg4[%c7, %c0_68, %c0_69] : memref<9x3x8xf32, #tpu.memory_space<vmem>>, vector<1x3x8xf32>
      %86 = vector.shape_cast %85 : vector<1x3x8xf32> to vector<3x8xf32>
      %cst_70 = arith.constant dense<0.000000e+00> : vector<16x8xf32>
      %87 = tpu.matmul %84, %86, %cst_70 {dimension_numbers = #tpu.dot_dimension_numbers<[1], [0], [0], [1], [0, 0, 1, 1], [], []>} : vector<16x3xf32>, vector<3x8xf32>, vector<16x8xf32> -> vector<16x8xf32>
      %88 = arith.addf %80, %87 : vector<16x8xf32>
      %c2_i32_71 = arith.constant 2 : i32
      %89 = arith.addi %23, %c2_i32_71 : i32
      %90 = arith.index_cast %89 : i32 to index
      %c2_72 = arith.constant 2 : index
      %c0_73 = arith.constant 0 : index
      %91 = vector.load %arg7[%90, %c2_72, %c0_73] : memref<9x18x3xf32, #tpu.memory_space<vmem>>, vector<1x16x3xf32>
      %92 = vector.shape_cast %91 : vector<1x16x3xf32> to vector<16x3xf32>
      %c8 = arith.constant 8 : index
      %c0_74 = arith.constant 0 : index
      %c0_75 = arith.constant 0 : index
      %93 = vector.load %arg4[%c8, %c0_74, %c0_75] : memref<9x3x8xf32, #tpu.memory_space<vmem>>, vector<1x3x8xf32>
      %94 = vector.shape_cast %93 : vector<1x3x8xf32> to vector<3x8xf32>
      %cst_76 = arith.constant dense<0.000000e+00> : vector<16x8xf32>
      %95 = tpu.matmul %92, %94, %cst_76 {dimension_numbers = #tpu.dot_dimension_numbers<[1], [0], [0], [1], [0, 0, 1, 1], [], []>} : vector<16x3xf32>, vector<3x8xf32>, vector<16x8xf32> -> vector<16x8xf32>
      %96 = arith.addf %88, %95 : vector<16x8xf32>
      %c0_77 = arith.constant 0 : index
      %c0_78 = arith.constant 0 : index
      %97 = vector.load %arg5[%c0_77, %c0_78] : memref<1x8xf32, #tpu.memory_space<vmem>>, vector<1x8xf32>
      %98 = vector.broadcast %97 : vector<1x8xf32> to vector<16x8xf32>
      %99 = arith.addf %96, %98 : vector<16x8xf32>
      %cst_79 = arith.constant 0.000000e+00 : f32
      %100 = vector.broadcast %cst_79 : f32 to vector<16x8xf32>
      %101 = arith.maximumf %99, %100 : vector<16x8xf32>
      %cst_80 = arith.constant dense<0.000000e+00> : vector<8x8xf32>
      %102 = tpu.matmul %21, %101, %cst_80 {dimension_numbers = #tpu.dot_dimension_numbers<[1], [0], [0], [1], [0, 0, 1, 1], [], []>} : vector<8x16xf32>, vector<16x8xf32>, vector<8x8xf32> -> vector<8x8xf32>
      %c0_81 = arith.constant 0 : index
      %103 = arith.index_cast %arg8 : i32 to index
      %c0_82 = arith.constant 0 : index
      %c0_83 = arith.constant 0 : index
      %104 = vector.load %arg6[%c0_81, %103, %c0_82, %c0_83] : memref<1x4x8x8xf32, #tpu.memory_space<vmem>>, vector<1x1x8x8xf32>
      %105 = vector.shape_cast %104 : vector<1x1x8x8xf32> to vector<8x8xf32>
      %106 = vector.shape_cast %102 : vector<8x8xf32> to vector<1x1x8x8xf32>
      tpu.vector_store %arg6[%c0_81, %103, %c0_82, %c0_83], %106 {strides = array<i32>} : memref<1x4x8x8xf32, #tpu.memory_space<vmem>>, vector<1x1x8x8xf32>,
    }
    %c4_i32_18 = arith.constant 4 : i32
    return
  }
  func.func @transform_0(%arg0: i32, %arg1: i32) -> (i32, i32, i32, i32) {
    %c8_i32 = arith.constant 8 : i32
    %0 = arith.muli %arg1, %c8_i32 : i32
    %c1_i32 = arith.constant 1 : i32
    %1 = arith.subi %0, %c1_i32 : i32
    %c0_i32 = arith.constant 0 : i32
    %2 = arith.maxsi %1, %c0_i32 : i32
    %c0_i32_0 = arith.constant 0 : i32
    %c0_i32_1 = arith.constant 0 : i32
    %c0_i32_2 = arith.constant 0 : i32
    return %arg0, %2, %c0_i32_0, %c0_i32_1 : i32, i32, i32, i32
  }
  func.func @transform_1(%arg0: i32, %arg1: i32) -> (i32, i32, i32, i32) {
    %c0_i32 = arith.constant 0 : i32
    %c0_i32_0 = arith.constant 0 : i32
    %c0_i32_1 = arith.constant 0 : i32
    return %arg0, %arg1, %c0_i32, %c0_i32_0 : i32, i32, i32, i32
  }
  func.func @transform_2(%arg0: i32, %arg1: i32) -> (i32, i32, i32) {
    %c0_i32 = arith.constant 0 : i32
    %c0_i32_0 = arith.constant 0 : i32
    %c0_i32_1 = arith.constant 0 : i32
    %c0_i32_2 = arith.constant 0 : i32
    return %c0_i32, %c0_i32_0, %c0_i32_1 : i32, i32, i32
  }
  func.func @transform_3(%arg0: i32, %arg1: i32) -> (i32, i32) {
    %c0_i32 = arith.constant 0 : i32
    %c0_i32_0 = arith.constant 0 : i32
    %c0_i32_1 = arith.constant 0 : i32
    return %c0_i32, %c0_i32_0 : i32, i32
  }
  func.func @transform_4(%arg0: i32, %arg1: i32) -> (i32, i32, i32, i32) {
    %c0_i32 = arith.constant 0 : i32
    %c0_i32_0 = arith.constant 0 : i32
    %c0_i32_1 = arith.constant 0 : i32
    return %arg0, %arg1, %c0_i32, %c0_i32_0 : i32, i32, i32, i32
  }
}

</mosaic_0001>

<llo_original>
// kernel: tpu_custom_call.1
$region0: #{tpu_custom_call.1}
  #allocation0 [shape = 'u32[]', space=smem, size = 0x4, offset = 0x4, fixed_abs, tag = 'smem constant byte address 0x4 - core index']
  #allocation1 [shape = 'u32[144,128]{1,0:T(1,128)}', space=vmem, size = 0x12000, scoped, tag = 'internal scratch']
  #allocation2 [shape = 'f32[9,18,3]{2,1,0:T(8,128)}', space=vmem, size = 0x1b000, scoped, tag = 'scratch operand']
  %s0 = inlined_call_operand.vmem [shape: f32[2,16,16,3], index: 0, kind: input, shape index: {}]
  %s1 = inlined_call_operand.vmem [shape: f32[2,16,16,3], index: 1, kind: input, shape index: {}]
  %s2 = inlined_call_operand.vmem [shape: f32[9,3,8], index: 2, kind: input, shape index: {}]
  %s3 = inlined_call_operand.vmem [shape: f32[1,8], index: 3, kind: input, shape index: {}]
  %s4 = inlined_call_operand.hbm [shape: f32[2,8,8,8], index: 4, kind: output, shape index: {}]
  %s5 = sld [smem:[#allocation0]]
  $region63: #{tpu_custom_call.1} parent=0
    _
  %s7 = ssub.s32 1, %s5
  %s8 = scalar_select 0, %s7, %s5
  $region1: #{tpu_custom_call.1} parent=0
    #allocation3 [shape = 'u8[32768]{0}', space=vmem, size = 0x8000, scoped, tag = 'output window, operand 0']
    #allocation4 [shape = 's32[2]{0}', space=sflag, size = 0x8, scoped, tag = 'scoped memory for tpu_custom_call.1']
    %9 = vsyncpa [#allocation4], 0
    %s10 = scalar_lea.sflag [#allocation4], 1
    %11 = vsyncpa %s10, 0
    loop: start=0, step=1, limit=6
    $region2: #{tpu_custom_call.1} parent=1 // loop_pre_header
      _
    $region3: #{tpu_custom_call.1} parent=1 // loop_header
      %s13 = sphi 0, %s17
      %p14 = scmp.ge.s32.totalorder %s13, 6
      %s20 = sphi 0, %s32
      %s21 = sphi 0, %s28
      %s22 = sphi 0, %s20
      %s23 = sphi 0, %s21
      %s24 = sphi 0, %s22
      %s25 = sphi 0, %s23
      %s45 = sphi 0, %s47
      %s48 = sphi 0, %s45
      %s49 = sphi 0, %s48
      %s65 = sphi 0, %s49
      %s73 = sphi 0, %s75
      %s76 = sphi 0, %s73
      %s77 = sphi 0, %s76
      %s93 = sphi 0, %s77
      %s97 = sphi 0, %s97
      %s99 = sphi 0, %s97
      %s100 = sphi 0, %s99
      %s114 = sphi 0, %s100
      %s118 = sphi 0, %s118
      %s120 = sphi 0, %s118
      %s121 = sphi 0, %s120
      %s135 = sphi 0, %s121
      %s143 = sphi 0, %s145
      %s146 = sphi 0, %s143
      %s147 = sphi 0, %s146
      %s163 = sphi 0, %s147
    $region4: #{tpu_custom_call.1} parent=1 // loop_header_branch
      %16 = sbr.rel (%p14) target = $region8
    $region5: #{tpu_custom_call.1} parent=1 // loop_body
      %s18 = ssub.s32 %s13, 1
      %s19 = ssub.s32 %s13, 2
      %s26 = sadd.s32 1, %s21
      %p27 = scmp.ge.s32.totalorder %s26, 2
      %s28 = scalar_select %p27, 0, %s26
      %s29 = sadd.s32 1, %s20
      %s30 = scalar_select %p27, %s29, %s20
      %p31 = scmp.ge.s32.totalorder %s30, 2
      %s32 = scalar_select %p31, 0, %s30
      %s33 = smul.u32 %s21, 8
      %s34 = ssub.s32 %s33, 1
      %p35 = scmp.gt.s32.totalorder %s34, 0
      %s36 = scalar_select %p35, %s34, 0
      %s37 = smul.u32 %s28, 8
      %s38 = ssub.s32 %s37, 1
      %p39 = scmp.gt.s32.totalorder %s38, 0
      %s40 = scalar_select %p39, %s38, 0
      %s41 = ssub.s32 %s20, %s32
      %s42 = ssub.s32 %s36, %s40
      %s43 = sor.u32 %s41, %s42
      %p44 = scmp.eq.s32.totalorder %s43, 0
      %s46 = sadd.s32 %s45, 1
      %s47 = scalar_select %p44, %s45, %s46
      %p50 = pneg %p44
      %p51 = scmp.eq.s32.totalorder %s13, 3
      %p52 = por %p50, %p51
      %p53 = scmp.ne.s32.totalorder %s45, %s48
      %p54 = scmp.eq.s32.totalorder %s13, 0
      %p55 = por %p53, %p54
      %p56 = scmp.ne.s32.totalorder %s45, %s48
      %p57 = scmp.eq.s32.totalorder %s18, 3
      %p58 = por %p56, %p57
      %p59 = scmp.ne.s32.totalorder %s48, %s49
      %p60 = scmp.eq.s32.totalorder %s18, 0
      %p61 = por %p59, %p60
      %p62 = scmp.ne.s32.totalorder %s48, %s49
      %p63 = scmp.eq.s32.totalorder %s19, 3
      %p64 = por %p62, %p63
      %p66 = scmp.ne.s32.totalorder %s49, %s65
      %p67 = scmp.eq.s32.totalorder %s19, 0
      %p68 = por %p66, %p67
      %s69 = ssub.s32 %s20, %s32
      %s70 = ssub.s32 %s21, %s28
      %s71 = sor.u32 %s69, %s70
      %p72 = scmp.eq.s32.totalorder %s71, 0
      %s74 = sadd.s32 %s73, 1
      %s75 = scalar_select %p72, %s73, %s74
      %p78 = pneg %p72
      %p79 = scmp.eq.s32.totalorder %s13, 3
      %p80 = por %p78, %p79
      %p81 = scmp.ne.s32.totalorder %s73, %s76
      %p82 = scmp.eq.s32.totalorder %s13, 0
      %p83 = por %p81, %p82
      %p84 = scmp.ne.s32.totalorder %s73, %s76
      %p85 = scmp.eq.s32.totalorder %s18, 3
      %p86 = por %p84, %p85
      %p87 = scmp.ne.s32.totalorder %s76, %s77
      %p88 = scmp.eq.s32.totalorder %s18, 0
      %p89 = por %p87, %p88
      %p90 = scmp.ne.s32.totalorder %s76, %s77
      %p91 = scmp.eq.s32.totalorder %s19, 3
      %p92 = por %p90, %p91
      %p94 = scmp.ne.s32.totalorder %s77, %s93
      %p95 = scmp.eq.s32.totalorder %s19, 0
      %p96 = por %p94, %p95
      %s98 = sadd.s32 %s97, 1
      %p101 = scmp.eq.s32.totalorder %s13, 3
      %p102 = scmp.ne.s32.totalorder %s97, %s99
      %p103 = scmp.eq.s32.totalorder %s13, 0
      %p104 = por %p102, %p103
      %p105 = scmp.ne.s32.totalorder %s97, %s99
      %p106 = scmp.eq.s32.totalorder %s18, 3
      %p107 = por %p105, %p106
      %p108 = scmp.ne.s32.totalorder %s99, %s100
      %p109 = scmp.eq.s32.totalorder %s18, 0
      %p110 = por %p108, %p109
      %p111 = scmp.ne.s32.totalorder %s99, %s100
      %p112 = scmp.eq.s32.totalorder %s19, 3
      %p113 = por %p111, %p112
      %p115 = scmp.ne.s32.totalorder %s100, %s114
      %p116 = scmp.eq.s32.totalorder %s19, 0
      %p117 = por %p115, %p116
      %s119 = sadd.s32 %s118, 1
      %p122 = scmp.eq.s32.totalorder %s13, 3
      %p123 = scmp.ne.s32.totalorder %s118, %s120
      %p124 = scmp.eq.s32.totalorder %s13, 0
      %p125 = por %p123, %p124
      %p126 = scmp.ne.s32.totalorder %s118, %s120
      %p127 = scmp.eq.s32.totalorder %s18, 3
      %p128 = por %p126, %p127
      %p129 = scmp.ne.s32.totalorder %s120, %s121
      %p130 = scmp.eq.s32.totalorder %s18, 0
      %p131 = por %p129, %p130
      %p132 = scmp.ne.s32.totalorder %s120, %s121
      %p133 = scmp.eq.s32.totalorder %s19, 3
      %p134 = por %p132, %p133
      %p136 = scmp.ne.s32.totalorder %s121, %s135
      %p137 = scmp.eq.s32.totalorder %s19, 0
      %p138 = por %p136, %p137
      %s139 = ssub.s32 %s20, %s32
      %s140 = ssub.s32 %s21, %s28
      %s141 = sor.u32 %s139, %s140
      %p142 = scmp.eq.s32.totalorder %s141, 0
      %s144 = sadd.s32 %s143, 1
      %s145 = scalar_select %p142, %s143, %s144
      %p148 = pneg %p142
      %p149 = scmp.eq.s32.totalorder %s13, 3
      %p150 = por %p148, %p149
      %p151 = scmp.ne.s32.totalorder %s143, %s146
      %p152 = scmp.eq.s32.totalorder %s13, 0
      %p153 = por %p151, %p152
      %p154 = scmp.ne.s32.totalorder %s143, %s146
      %p155 = scmp.eq.s32.totalorder %s18, 3
      %p156 = por %p154, %p155
      %p157 = scmp.ne.s32.totalorder %s146, %s147
      %p158 = scmp.eq.s32.totalorder %s18, 0
      %p159 = por %p157, %p158
      %p160 = scmp.ne.s32.totalorder %s146, %s147
      %p161 = scmp.eq.s32.totalorder %s19, 3
      %p162 = por %p160, %p161
      %p164 = scmp.ne.s32.totalorder %s147, %s163
      %p165 = scmp.eq.s32.totalorder %s19, 0
      %p166 = por %p164, %p165
      %p167 = scmp.le.s32.totalorder 1, %s13
      %p168 = scmp.lt.s32.totalorder %s13, 5
      %p169 = pnand %p167, %p168
      %p170 = pneg %p169
      // Predicated region
      $region9: #{tpu_custom_call.1} parent=5 // pred_check
        _
      $region10: #{tpu_custom_call.1} parent=5 // pred_check_branch
        %172 = sbr.rel (%p169) target = $region12
      $region11: #{tpu_custom_call.1} parent=5 // pred_region
        %s173 = ssub.s32 %s13, 1
        // Predicated region
        $region13: #{tpu_custom_call.1} parent=11 // pred_check
          %p174 = pneg %p110
        $region14: #{tpu_custom_call.1} parent=11 // pred_check_branch
          %176 = sbr.rel (%p174) target = $region16
        $region15: #{tpu_custom_call.1} parent=11 // pred_region
          _
        $region16: #{tpu_custom_call.1} parent=11 // pred_fallthru
          _
        // Predicated region
        $region17: #{tpu_custom_call.1} parent=11 // pred_check
          %p177 = pneg %p131
        $region18: #{tpu_custom_call.1} parent=11 // pred_check_branch
          %179 = sbr.rel (%p177) target = $region20
        $region19: #{tpu_custom_call.1} parent=11 // pred_region
          _
        $region20: #{tpu_custom_call.1} parent=11 // pred_fallthru
          _
      $region12: #{tpu_custom_call.1} parent=5 // pred_fallthru
        _
      %p180 = scmp.lt.s32.totalorder %s13, 4
      // Predicated region
      $region21: #{tpu_custom_call.1} parent=5 // pred_check
        %p181 = pneg %p180
      $region22: #{tpu_custom_call.1} parent=5 // pred_check_branch
        %183 = sbr.rel (%p181) target = $region24
      $region23: #{tpu_custom_call.1} parent=5 // pred_region
        // Predicated region
        $region25: #{tpu_custom_call.1} parent=23 // pred_check
          %p184 = pneg %p55
        $region26: #{tpu_custom_call.1} parent=23 // pred_check_branch
          %186 = sbr.rel (%p184) target = $region28
        $region27: #{tpu_custom_call.1} parent=23 // pred_region
          %s187 = smul.u32 %s21, 8
          %s188 = ssub.s32 %s187, 1
          %p189 = scmp.gt.s32.totalorder %s188, 0
          %s190 = scalar_select %p189, %s188, 0
          %p191 = scmp.lt.s32.totalorder %s20, 1
          %s192 = scalar_select %p191, %s20, 1
          %p193 = scmp.lt.s32.totalorder %s190, 15
          %s194 = scalar_select %p193, %s190, 15
          %s195 = smul.addr %s194, 2
          %s196 = smul.addr %s192, 32
          %s197 = sadd.s32 %s195, %s196
          %s198 = smul.addr %s197, 8
          %s199 = scalar_lea.vmem %s0, %s198
          %s200 = smul.u32 %s21, 8
          %s201 = ssub.s32 %s200, 1
          %p202 = scmp.gt.s32.totalorder %s201, 0
          %s203 = scalar_select %p202, %s201, 0
        $region28: #{tpu_custom_call.1} parent=23 // pred_fallthru
          _
        // Predicated region
        $region29: #{tpu_custom_call.1} parent=23 // pred_check
          %p204 = pneg %p83
        $region30: #{tpu_custom_call.1} parent=23 // pred_check_branch
          %206 = sbr.rel (%p204) target = $region32
        $region31: #{tpu_custom_call.1} parent=23 // pred_region
          %s207 = smul.u32 8, %s21
          %p208 = scmp.lt.s32.totalorder %s20, 1
          %s209 = scalar_select %p208, %s20, 1
          %p210 = scmp.lt.s32.totalorder %s207, 15
          %s211 = scalar_select %p210, %s207, 15
          %s212 = smul.addr %s211, 2
          %s213 = smul.addr %s209, 32
          %s214 = sadd.s32 %s212, %s213
          %s215 = smul.addr %s214, 8
          %s216 = scalar_lea.vmem %s1, %s215
          %s217 = smul.u32 8, %s21
        $region32: #{tpu_custom_call.1} parent=23 // pred_fallthru
          _
      $region24: #{tpu_custom_call.1} parent=5 // pred_fallthru
        _
      %p218 = scmp.le.s32.totalorder 1, %s13
      %p219 = scmp.lt.s32.totalorder %s13, 5
      %p220 = pnand %p218, %p219
      %p221 = pneg %p220
      // Predicated region
      $region33: #{tpu_custom_call.1} parent=5 // pred_check
        _
      $region34: #{tpu_custom_call.1} parent=5 // pred_check_branch
        %223 = sbr.rel (%p220) target = $region36
      $region35: #{tpu_custom_call.1} parent=5 // pred_region
        %s224 = ssub.s32 %s13, 1
        %s225 = smul.u32 %s23, 8
        %s226 = ssub.s32 %s225, 1
        %p227 = scmp.gt.s32.totalorder %s226, 0
        %s228 = scalar_select %p227, %s226, 0
        %p229 = scmp.lt.s32.totalorder %s22, 1
        %s230 = scalar_select %p229, %s22, 1
        %p231 = scmp.lt.s32.totalorder %s228, 15
        %s232 = scalar_select %p231, %s228, 15
        %s233 = smul.addr %s232, 2
        %s234 = smul.addr %s230, 32
        %s235 = sadd.s32 %s233, %s234
        %s236 = smul.addr %s235, 8
        %s237 = scalar_lea.vmem %s0, %s236
        %p238 = pneg %p61
        %p239 = pneg %p58
        %s240 = smul.u32 8, %s23
        %p241 = scmp.lt.s32.totalorder %s22, 1
        %s242 = scalar_select %p241, %s22, 1
        %p243 = scmp.lt.s32.totalorder %s240, 15
        %s244 = scalar_select %p243, %s240, 15
        %s245 = smul.addr %s244, 2
        %s246 = smul.addr %s242, 32
        %s247 = sadd.s32 %s245, %s246
        %s248 = smul.addr %s247, 8
        %s249 = scalar_lea.vmem %s1, %s248
        %p250 = pneg %p89
        %p251 = pneg %p86
        %p252 = pneg %p110
        %p253 = pneg %p107
        %p254 = pneg %p131
        %p255 = pneg %p128
        %p256 = pneg %p159
        %p257 = pneg %p156
        %s258 = sand.u32 %s146, 1
        %s259 = scalar_lea.sflag [#allocation4], %s258
        %s260 = sand.u32 %s146, 1
        %s261 = smul.addr %s260, 32
        %s262 = scalar_lea.vmem [#allocation3], %s261
        %s263 = smul.u32 %s23, 8
        %s264 = ssub.s32 %s263, 1
        %p265 = scmp.gt.s32.totalorder %s264, 0
        %s266 = scalar_select %p265, %s264, 0
        %p267 = scmp.lt.s32.totalorder %s22, 1
        %s268 = scalar_select %p267, %s22, 1
        %p269 = scmp.lt.s32.totalorder %s266, 15
        %s270 = scalar_select %p269, %s266, 15
        %s271 = smul.addr %s270, 2
        %s272 = smul.addr %s268, 32
        %s273 = sadd.s32 %s271, %s272
        %s274 = smul.addr %s273, 8
        %s275 = scalar_lea.vmem %s0, %s274
        %s276 = smul.u32 %s23, 8
        %s277 = ssub.s32 %s276, 1
        %p278 = scmp.gt.s32.totalorder %s277, 0
        %s279 = scalar_select %p278, %s277, 0
        %s280 = smul.u32 8, %s23
        %p281 = scmp.lt.s32.totalorder %s22, 1
        %s282 = scalar_select %p281, %s22, 1
        %p283 = scmp.lt.s32.totalorder %s280, 15
        %s284 = scalar_select %p283, %s280, 15
        %s285 = smul.addr %s284, 2
        %s286 = smul.addr %s282, 32
        %s287 = sadd.s32 %s285, %s286
        %s288 = smul.addr %s287, 8
        %s289 = scalar_lea.vmem %s1, %s288
        %s290 = smul.u32 8, %s23
        %s291 = smul.u32 4, %s23
        %vm292 = vcmask 16384
        %293 = vst.msk [vmem:[#allocation2] sm:$0x1] %vm292, 0.0
        %294 = vst.msk [vmem:[#allocation2 + $0x18] sm:$0x1] %vm292, 0.0
        %295 = vst.msk [vmem:[#allocation2 + $0x30] sm:$0x1] %vm292, 0.0
        %296 = vst.msk [vmem:[#allocation2 + $0x48] sm:$0x1] %vm292, 0.0
        %297 = vst.msk [vmem:[#allocation2 + $0x60] sm:$0x1] %vm292, 0.0
        %298 = vst.msk [vmem:[#allocation2 + $0x78] sm:$0x1] %vm292, 0.0
        %299 = vst.msk [vmem:[#allocation2 + $0x90] sm:$0x1] %vm292, 0.0
        %300 = vst.msk [vmem:[#allocation2 + $0xa8] sm:$0x1] %vm292, 0.0
        %301 = vst.msk [vmem:[#allocation2 + $0xc0] sm:$0x1] %vm292, 0.0
        %302 = vst.msk [vmem:[#allocation2 + $0x11] sm:$0x1] %vm292, 0.0
        %303 = vst.msk [vmem:[#allocation2 + $0x29] sm:$0x1] %vm292, 0.0
        %304 = vst.msk [vmem:[#allocation2 + $0x41] sm:$0x1] %vm292, 0.0
        %305 = vst.msk [vmem:[#allocation2 + $0x59] sm:$0x1] %vm292, 0.0
        %306 = vst.msk [vmem:[#allocation2 + $0x71] sm:$0x1] %vm292, 0.0
        %307 = vst.msk [vmem:[#allocation2 + $0x89] sm:$0x1] %vm292, 0.0
        %308 = vst.msk [vmem:[#allocation2 + $0xa1] sm:$0x1] %vm292, 0.0
        %309 = vst.msk [vmem:[#allocation2 + $0xb9] sm:$0x1] %vm292, 0.0
        %310 = vst.msk [vmem:[#allocation2 + $0xd1] sm:$0x1] %vm292, 0.0
        %v311 = vld [vmem:[%s275] sm:$0xff]
        %v312 = vld [vmem:[%s275 + $0x8] sm:$0xff]
        %s313 = smul.u32 %s23, 8
        %s314 = ssub.s32 %s313, 1
        %p315 = scmp.ge.s32.totalorder %s314, 0
        %s316 = scalar_select %p315, 1, 0
        %v317 = vstv %s316
        %vm318 = vcmp.eq.s32.totalorder %v317, 1
        %v319 = vsel %vm318, %v311, 0.0
        %v320 = vsel %vm318, %v312, 0.0
        %vm321 = vcmask 23552
        %322 = vst.msk [vmem:[#allocation2 + $0x1] sm:$0xff] %vm321, %v319
        %323 = vst.msk [vmem:[#allocation2 + $0x9] sm:$0xff] %vm321, %v320
        loop: start=0, step=1, limit=8
        $region37: #{tpu_custom_call.1} parent=35 // loop_pre_header
          _
        $region38: #{tpu_custom_call.1} parent=35 // loop_header
          %s325 = sphi 0, %s329
          %p326 = scmp.ge.s32.totalorder %s325, 8
        $region39: #{tpu_custom_call.1} parent=35 // loop_header_branch
          %328 = sbr.rel (%p326) target = $region43
        $region40: #{tpu_custom_call.1} parent=35 // loop_body
          %s330 = smul.u32 %s325, 16
          %s331 = scalar_lea.vmem %s289, %s330
          %v332 = vld [vmem:[%s331] sm:$0xff]
          %v333 = vld [vmem:[%s331 + $0x8] sm:$0xff]
          %s334 = sadd.s32 %s313, %s325
          %p335 = scmp.lt.s32.totalorder %s334, 16
          %s336 = scalar_select %p335, 1, 0
          %v337 = vstv %s336
          %vm338 = vcmp.eq.s32.totalorder %v337, 1
          %v339 = vsel %vm338, %v332, 0.0
          %v340 = vsel %vm338, %v333, 0.0
          %s341 = sadd.s32 %s325, 1
          %s342 = smul.u32 %s341, 24
          %s343 = scalar_lea.vmem [#allocation2], %s342
          %344 = vst.msk [vmem:[%s343 + $0x1] sm:$0xff] %vm321, %v339
          %345 = vst.msk [vmem:[%s343 + $0x9] sm:$0xff] %vm321, %v340
        $region41: #{tpu_custom_call.1} parent=35 // loop_footer
          %s329 = sadd.s32 1, %s325
        $region42: #{tpu_custom_call.1} parent=35 // loop_footer_branch
          %324 = sbr.rel target = $region38
        $region43: #{tpu_custom_call.1} parent=35 // loop_exit
          _
        %v346 = vlaneseq
        %v347 = vshrl.u32 %v346, 7
        %v348 = vlaneseq
        %v349 = vand.u32 %v348, 127
        %v350 = vmul.u32 %v347, 2
        %vm351 = vcmp.eq.s32.totalorder %v349, %v350
        %v352 = vsel %vm351, 1, 0
        %v353 = vcvt.s32.f32 %v352
        loop: start=0, step=1, limit=4
        $region44: #{tpu_custom_call.1} parent=35 // loop_pre_header
          _
        $region45: #{tpu_custom_call.1} parent=35 // loop_header
          %s355 = sphi 0, %s359
          %p356 = scmp.ge.s32.totalorder %s355, 4
        $region46: #{tpu_custom_call.1} parent=35 // loop_header_branch
          %358 = sbr.rel (%p356) target = $region50
        $region47: #{tpu_custom_call.1} parent=35 // loop_body
          %s360 = smul.u32 %s355, 2
          %s361 = smul.u32 %s360, 24
          %s362 = scalar_lea.vmem [#allocation2], %s361
          %v363 = vld [vmem:[%s362] sm:$0xff]
          %v364 = vld [vmem:[%s362 + $0x8] sm:$0xff]
          %v365 = vld [vmem:[%s2] sm:$0x7]
          %v366 = vld [vmem:[%s362 + $0x1] sm:$0xff]
          %v367 = vld [vmem:[%s362 + $0x9] sm:$0xff]
          %s368 = scalar_lea.vmem %s2, 4
          %v369 = vld [vmem:[%s368] sm:$0x7]
          %v371 = vsel %vm321, %v366, 0
          %v374 = vsel %vm321, %v367, 0
          %vm376 = vcmask 1042432
          %v378 = vsel %vm376, %v369, 0
          %380 = vmatprep.subr.mxu0 0.0
          %381 = vmatpush1.msra.mxu0 0.0
          %382 = vmatprep.subr.mxu0 0.0
          %383 = vmatpush1.msra.mxu0 0.0
          %384 = vmatprep.subr.mxu0 0.0
          %385 = vmatpush1.msra.mxu0 0.0
          %386 = vmatprep.subr.mxu0 0.0
          %387 = vmatpush1.msra.mxu0 0.0
          %388 = vmatprep.subr.mxu0 0.0
          %389 = vmatpush1.msra.mxu0 0.0
          %390 = vmatprep.subr.mxu0 0.0
          %391 = vmatpush1.msra.mxu0 0.0
          %392 = vmatprep.subr.mxu0 0.0
          %393 = vmatpush1.msra.mxu0 0.0
          %394 = vmatprep.subr.mxu0 0.0
          %395 = vmatpush1.msra.mxu0 0.0
          %396 = vmatprep.subr.mxu0 0.0
          %397 = vmatpush1.msra.mxu0 0.0
          %398 = vmatprep.subr.mxu0 0.0
          %399 = vmatpush1.msra.mxu0 0.0
          %400 = vmatprep.subr.mxu0 0.0
          %401 = vmatpush1.msra.mxu0 0.0
          %402 = vmatprep.subr.mxu0 0.0
          %403 = vmatpush1.msra.mxu0 0.0
          %404 = vmatprep.subr.mxu0 0.0
          %405 = vmatpush1.msra.mxu0 0.0
          %406 = vmatprep.subr.mxu0 0.0
          %407 = vmatpush1.msra.mxu0 0.0
          %408 = vmatprep.subr.mxu0 0.0
          %409 = vmatpush1.msra.mxu0 0.0
          %410 = vmatprep.subr.mxu0 0.0
          %411 = vmatpush1.msra.mxu0 %v378
          %412 = vmatprep.subr.mxu0 0.0
          %413 = vmatpush2.msra.mxu0 0.0
          %414 = vmatprep.subr.mxu0 0.0
          %415 = vmatpush2.msra.mxu0 0.0
          %416 = vmatprep.subr.mxu0 0.0
          %417 = vmatpush2.msra.mxu0 0.0
          %418 = vmatprep.subr.mxu0 0.0
          %419 = vmatpush2.msra.mxu0 0.0
          %420 = vmatprep.subr.mxu0 0.0
          %421 = vmatpush2.msra.mxu0 0.0
          %422 = vmatprep.subr.mxu0 0.0
          %423 = vmatpush2.msra.mxu0 0.0
          %424 = vmatprep.subr.mxu0 0.0
          %425 = vmatpush2.msra.mxu0 0.0
          %426 = vmatprep.subr.mxu0 0.0
          %427 = vmatpush2.msra.mxu0 0.0
          %428 = vmatprep.subr.mxu0 0.0
          %429 = vmatpush2.msra.mxu0 0.0
          %430 = vmatprep.subr.mxu0 0.0
          %431 = vmatpush2.msra.mxu0 0.0
          %432 = vmatprep.subr.mxu0 0.0
          %433 = vmatpush2.msra.mxu0 0.0
          %434 = vmatprep.subr.mxu0 0.0
          %435 = vmatpush2.msra.mxu0 0.0
          %436 = vmatprep.subr.mxu0 0.0
          %437 = vmatpush2.msra.mxu0 0.0
          %438 = vmatprep.subr.mxu0 0.0
          %439 = vmatpush2.msra.mxu0 0.0
          %440 = vmatprep.subr.mxu0 0.0
          %441 = vmatpush2.msra.mxu0 0.0
          %442 = vmatprep.subr.mxu0 0.0
          %443 = vmatpush2.msra.mxu0 0.0
          %444 = vmatprep.mubr.f32.mxu0 0.0
          %445 = vmatmul.mubr.f32.gmra.mxu0 %v371
          %v446 = vpop.f32.mrf.mxu0
          %v447 = vadd.f32 0.0, %v446
          %v448 = vpop.f32.mrf.mxu0
          %449 = vmatprep.mubr.f32.mxu0 0.0
          %450 = vmatmul.mubr.f32.gmra.mxu0 %v374
          %v451 = vpop.f32.mrf.mxu0
          %v452 = vadd.f32 0.0, %v451
          %v453 = vpop.f32.mrf.mxu0
          %454 = vdwg.mxu0
          %v456 = vsel %vm321, %v363, 0
          %v459 = vsel %vm321, %v364, 0
          %v462 = vsel %vm376, %v365, 0
          %464 = vmatprep.subr.mxu0 0.0
          %465 = vmatpush1.msra.mxu0 0.0
          %466 = vmatprep.subr.mxu0 0.0
          %467 = vmatpush1.msra.mxu0 0.0
          %468 = vmatprep.subr.mxu0 0.0
          %469 = vmatpush1.msra.mxu0 0.0
          %470 = vmatprep.subr.mxu0 0.0
          %471 = vmatpush1.msra.mxu0 0.0
          %472 = vmatprep.subr.mxu0 0.0
          %473 = vmatpush1.msra.mxu0 0.0
          %474 = vmatprep.subr.mxu0 0.0
          %475 = vmatpush1.msra.mxu0 0.0
          %476 = vmatprep.subr.mxu0 0.0
          %477 = vmatpush1.msra.mxu0 0.0
          %478 = vmatprep.subr.mxu0 0.0
          %479 = vmatpush1.msra.mxu0 0.0
          %480 = vmatprep.subr.mxu0 0.0
          %481 = vmatpush1.msra.mxu0 0.0
          %482 = vmatprep.subr.mxu0 0.0
          %483 = vmatpush1.msra.mxu0 0.0
          %484 = vmatprep.subr.mxu0 0.0
          %485 = vmatpush1.msra.mxu0 0.0
          %486 = vmatprep.subr.mxu0 0.0
          %487 = vmatpush1.msra.mxu0 0.0
          %488 = vmatprep.subr.mxu0 0.0
          %489 = vmatpush1.msra.mxu0 0.0
          %490 = vmatprep.subr.mxu0 0.0
          %491 = vmatpush1.msra.mxu0 0.0
          %492 = vmatprep.subr.mxu0 0.0
          %493 = vmatpush1.msra.mxu0 0.0
          %494 = vmatprep.subr.mxu0 0.0
          %495 = vmatpush1.msra.mxu0 %v462
          %496 = vmatprep.subr.mxu0 0.0
          %497 = vmatpush2.msra.mxu0 0.0
          %498 = vmatprep.subr.mxu0 0.0
          %499 = vmatpush2.msra.mxu0 0.0
          %500 = vmatprep.subr.mxu0 0.0
          %501 = vmatpush2.msra.mxu0 0.0
          %502 = vmatprep.subr.mxu0 0.0
          %503 = vmatpush2.msra.mxu0 0.0
          %504 = vmatprep.subr.mxu0 0.0
          %505 = vmatpush2.msra.mxu0 0.0
          %506 = vmatprep.subr.mxu0 0.0
          %507 = vmatpush2.msra.mxu0 0.0
          %508 = vmatprep.subr.mxu0 0.0
          %509 = vmatpush2.msra.mxu0 0.0
          %510 = vmatprep.subr.mxu0 0.0
          %511 = vmatpush2.msra.mxu0 0.0
          %512 = vmatprep.subr.mxu0 0.0
          %513 = vmatpush2.msra.mxu0 0.0
          %514 = vmatprep.subr.mxu0 0.0
          %515 = vmatpush2.msra.mxu0 0.0
          %516 = vmatprep.subr.mxu0 0.0
          %517 = vmatpush2.msra.mxu0 0.0
          %518 = vmatprep.subr.mxu0 0.0
          %519 = vmatpush2.msra.mxu0 0.0
          %520 = vmatprep.subr.mxu0 0.0
          %521 = vmatpush2.msra.mxu0 0.0
          %522 = vmatprep.subr.mxu0 0.0
          %523 = vmatpush2.msra.mxu0 0.0
          %524 = vmatprep.subr.mxu0 0.0
          %525 = vmatpush2.msra.mxu0 0.0
          %526 = vmatprep.subr.mxu0 0.0
          %527 = vmatpush2.msra.mxu0 0.0
          %528 = vmatprep.mubr.f32.mxu0 0.0
          %529 = vmatmul.mubr.f32.gmra.mxu0 %v456
          %v530 = vpop.f32.mrf.mxu0
          %v531 = vadd.f32 %v447, %v530
          %v532 = vpop.f32.mrf.mxu0
          %533 = vmatprep.mubr.f32.mxu0 0.0
          %534 = vmatmul.mubr.f32.gmra.mxu0 %v459
          %v535 = vpop.f32.mrf.mxu0
          %v536 = vadd.f32 %v452, %v535
          %v537 = vpop.f32.mrf.mxu0
          %538 = vdwg.mxu0
          %v539 = vld [vmem:[%s362 + $0x2] sm:$0xff]
          %v540 = vld [vmem:[%s362 + $0xa] sm:$0xff]
          %s541 = scalar_lea.vmem %s2, 8
          %v542 = vld [vmem:[%s541] sm:$0x7]
          %v544 = vsel %vm321, %v539, 0
          %v547 = vsel %vm321, %v540, 0
          %v550 = vsel %vm376, %v542, 0
          %552 = vmatprep.subr.mxu0 0.0
          %553 = vmatpush1.msra.mxu0 0.0
          %554 = vmatprep.subr.mxu0 0.0
          %555 = vmatpush1.msra.mxu0 0.0
          %556 = vmatprep.subr.mxu0 0.0
          %557 = vmatpush1.msra.mxu0 0.0
          %558 = vmatprep.subr.mxu0 0.0
          %559 = vmatpush1.msra.mxu0 0.0
          %560 = vmatprep.subr.mxu0 0.0
          %561 = vmatpush1.msra.mxu0 0.0
          %562 = vmatprep.subr.mxu0 0.0
          %563 = vmatpush1.msra.mxu0 0.0
          %564 = vmatprep.subr.mxu0 0.0
          %565 = vmatpush1.msra.mxu0 0.0
          %566 = vmatprep.subr.mxu0 0.0
          %567 = vmatpush1.msra.mxu0 0.0
          %568 = vmatprep.subr.mxu0 0.0
          %569 = vmatpush1.msra.mxu0 0.0
          %570 = vmatprep.subr.mxu0 0.0
          %571 = vmatpush1.msra.mxu0 0.0
          %572 = vmatprep.subr.mxu0 0.0
          %573 = vmatpush1.msra.mxu0 0.0
          %574 = vmatprep.subr.mxu0 0.0
          %575 = vmatpush1.msra.mxu0 0.0
          %576 = vmatprep.subr.mxu0 0.0
          %577 = vmatpush1.msra.mxu0 0.0
          %578 = vmatprep.subr.mxu0 0.0
          %579 = vmatpush1.msra.mxu0 0.0
          %580 = vmatprep.subr.mxu0 0.0
          %581 = vmatpush1.msra.mxu0 0.0
          %582 = vmatprep.subr.mxu0 0.0
          %583 = vmatpush1.msra.mxu0 %v550
          %584 = vmatprep.subr.mxu0 0.0
          %585 = vmatpush2.msra.mxu0 0.0
          %586 = vmatprep.subr.mxu0 0.0
          %587 = vmatpush2.msra.mxu0 0.0
          %588 = vmatprep.subr.mxu0 0.0
          %589 = vmatpush2.msra.mxu0 0.0
          %590 = vmatprep.subr.mxu0 0.0
          %591 = vmatpush2.msra.mxu0 0.0
          %592 = vmatprep.subr.mxu0 0.0
          %593 = vmatpush2.msra.mxu0 0.0
          %594 = vmatprep.subr.mxu0 0.0
          %595 = vmatpush2.msra.mxu0 0.0
          %596 = vmatprep.subr.mxu0 0.0
          %597 = vmatpush2.msra.mxu0 0.0
          %598 = vmatprep.subr.mxu0 0.0
          %599 = vmatpush2.msra.mxu0 0.0
          %600 = vmatprep.subr.mxu0 0.0
          %601 = vmatpush2.msra.mxu0 0.0
          %602 = vmatprep.subr.mxu0 0.0
          %603 = vmatpush2.msra.mxu0 0.0
          %604 = vmatprep.subr.mxu0 0.0
          %605 = vmatpush2.msra.mxu0 0.0
          %606 = vmatprep.subr.mxu0 0.0
          %607 = vmatpush2.msra.mxu0 0.0
          %608 = vmatprep.subr.mxu0 0.0
          %609 = vmatpush2.msra.mxu0 0.0
          %610 = vmatprep.subr.mxu0 0.0
          %611 = vmatpush2.msra.mxu0 0.0
          %612 = vmatprep.subr.mxu0 0.0
          %613 = vmatpush2.msra.mxu0 0.0
          %614 = vmatprep.subr.mxu0 0.0
          %615 = vmatpush2.msra.mxu0 0.0
          %616 = vmatprep.mubr.f32.mxu0 0.0
          %617 = vmatmul.mubr.f32.gmra.mxu0 %v544
          %v618 = vpop.f32.mrf.mxu0
          %v619 = vadd.f32 0.0, %v618
          %v620 = vpop.f32.mrf.mxu0
          %621 = vmatprep.mubr.f32.mxu0 0.0
          %622 = vmatmul.mubr.f32.gmra.mxu0 %v547
          %v623 = vpop.f32.mrf.mxu0
          %v624 = vadd.f32 0.0, %v623
          %v625 = vpop.f32.mrf.mxu0
          %626 = vdwg.mxu0
          %v627 = vadd.f32 %v531, %v619
          %v628 = vadd.f32 %v536, %v624
          %s629 = sadd.s32 %s360, 1
          %s630 = smul.u32 %s629, 24
          %s631 = scalar_lea.vmem [#allocation2], %s630
          %v632 = vld [vmem:[%s631] sm:$0xff]
          %v633 = vld [vmem:[%s631 + $0x8] sm:$0xff]
          %s634 = scalar_lea.vmem %s2, 12
          %v635 = vld [vmem:[%s634] sm:$0x7]
          %v637 = vsel %vm321, %v632, 0
          %v640 = vsel %vm321, %v633, 0
          %v643 = vsel %vm376, %v635, 0
          %645 = vmatprep.subr.mxu0 0.0
          %646 = vmatpush1.msra.mxu0 0.0
          %647 = vmatprep.subr.mxu0 0.0
          %648 = vmatpush1.msra.mxu0 0.0
          %649 = vmatprep.subr.mxu0 0.0
          %650 = vmatpush1.msra.mxu0 0.0
          %651 = vmatprep.subr.mxu0 0.0
          %652 = vmatpush1.msra.mxu0 0.0
          %653 = vmatprep.subr.mxu0 0.0
          %654 = vmatpush1.msra.mxu0 0.0
          %655 = vmatprep.subr.mxu0 0.0
          %656 = vmatpush1.msra.mxu0 0.0
          %657 = vmatprep.subr.mxu0 0.0
          %658 = vmatpush1.msra.mxu0 0.0
          %659 = vmatprep.subr.mxu0 0.0
          %660 = vmatpush1.msra.mxu0 0.0
          %661 = vmatprep.subr.mxu0 0.0
          %662 = vmatpush1.msra.mxu0 0.0
          %663 = vmatprep.subr.mxu0 0.0
          %664 = vmatpush1.msra.mxu0 0.0
          %665 = vmatprep.subr.mxu0 0.0
          %666 = vmatpush1.msra.mxu0 0.0
          %667 = vmatprep.subr.mxu0 0.0
          %668 = vmatpush1.msra.mxu0 0.0
          %669 = vmatprep.subr.mxu0 0.0
          %670 = vmatpush1.msra.mxu0 0.0
          %671 = vmatprep.subr.mxu0 0.0
          %672 = vmatpush1.msra.mxu0 0.0
          %673 = vmatprep.subr.mxu0 0.0
          %674 = vmatpush1.msra.mxu0 0.0
          %675 = vmatprep.subr.mxu0 0.0
          %676 = vmatpush1.msra.mxu0 %v643
          %677 = vmatprep.subr.mxu0 0.0
          %678 = vmatpush2.msra.mxu0 0.0
          %679 = vmatprep.subr.mxu0 0.0
          %680 = vmatpush2.msra.mxu0 0.0
          %681 = vmatprep.subr.mxu0 0.0
          %682 = vmatpush2.msra.mxu0 0.0
          %683 = vmatprep.subr.mxu0 0.0
          %684 = vmatpush2.msra.mxu0 0.0
          %685 = vmatprep.subr.mxu0 0.0
          %686 = vmatpush2.msra.mxu0 0.0
          %687 = vmatprep.subr.mxu0 0.0
          %688 = vmatpush2.msra.mxu0 0.0
          %689 = vmatprep.subr.mxu0 0.0
          %690 = vmatpush2.msra.mxu0 0.0
          %691 = vmatprep.subr.mxu0 0.0
          %692 = vmatpush2.msra.mxu0 0.0
          %693 = vmatprep.subr.mxu0 0.0
          %694 = vmatpush2.msra.mxu0 0.0
          %695 = vmatprep.subr.mxu0 0.0
          %696 = vmatpush2.msra.mxu0 0.0
          %697 = vmatprep.subr.mxu0 0.0
          %698 = vmatpush2.msra.mxu0 0.0
          %699 = vmatprep.subr.mxu0 0.0
          %700 = vmatpush2.msra.mxu0 0.0
          %701 = vmatprep.subr.mxu0 0.0
          %702 = vmatpush2.msra.mxu0 0.0
          %703 = vmatprep.subr.mxu0 0.0
          %704 = vmatpush2.msra.mxu0 0.0
          %705 = vmatprep.subr.mxu0 0.0
          %706 = vmatpush2.msra.mxu0 0.0
          %707 = vmatprep.subr.mxu0 0.0
          %708 = vmatpush2.msra.mxu0 0.0
          %709 = vmatprep.mubr.f32.mxu0 0.0
          %710 = vmatmul.mubr.f32.gmra.mxu0 %v637
          %v711 = vpop.f32.mrf.mxu0
          %v712 = vadd.f32 0.0, %v711
          %v713 = vpop.f32.mrf.mxu0
          %714 = vmatprep.mubr.f32.mxu0 0.0
          %715 = vmatmul.mubr.f32.gmra.mxu0 %v640
          %v716 = vpop.f32.mrf.mxu0
          %v717 = vadd.f32 0.0, %v716
          %v718 = vpop.f32.mrf.mxu0
          %719 = vdwg.mxu0
          %v720 = vadd.f32 %v627, %v712
          %v721 = vadd.f32 %v628, %v717
          %v722 = vld [vmem:[%s631 + $0x1] sm:$0xff]
          %v723 = vld [vmem:[%s631 + $0x9] sm:$0xff]
          %s724 = scalar_lea.vmem %s2, 16
          %v725 = vld [vmem:[%s724] sm:$0x7]
          %v727 = vsel %vm321, %v722, 0
          %v730 = vsel %vm321, %v723, 0
          %v733 = vsel %vm376, %v725, 0
          %735 = vmatprep.subr.mxu0 0.0
          %736 = vmatpush1.msra.mxu0 0.0
          %737 = vmatprep.subr.mxu0 0.0
          %738 = vmatpush1.msra.mxu0 0.0
          %739 = vmatprep.subr.mxu0 0.0
          %740 = vmatpush1.msra.mxu0 0.0
          %741 = vmatprep.subr.mxu0 0.0
          %742 = vmatpush1.msra.mxu0 0.0
          %743 = vmatprep.subr.mxu0 0.0
          %744 = vmatpush1.msra.mxu0 0.0
          %745 = vmatprep.subr.mxu0 0.0
          %746 = vmatpush1.msra.mxu0 0.0
          %747 = vmatprep.subr.mxu0 0.0
          %748 = vmatpush1.msra.mxu0 0.0
          %749 = vmatprep.subr.mxu0 0.0
          %750 = vmatpush1.msra.mxu0 0.0
          %751 = vmatprep.subr.mxu0 0.0
          %752 = vmatpush1.msra.mxu0 0.0
          %753 = vmatprep.subr.mxu0 0.0
          %754 = vmatpush1.msra.mxu0 0.0
          %755 = vmatprep.subr.mxu0 0.0
          %756 = vmatpush1.msra.mxu0 0.0
          %757 = vmatprep.subr.mxu0 0.0
          %758 = vmatpush1.msra.mxu0 0.0
          %759 = vmatprep.subr.mxu0 0.0
          %760 = vmatpush1.msra.mxu0 0.0
          %761 = vmatprep.subr.mxu0 0.0
          %762 = vmatpush1.msra.mxu0 0.0
          %763 = vmatprep.subr.mxu0 0.0
          %764 = vmatpush1.msra.mxu0 0.0
          %765 = vmatprep.subr.mxu0 0.0
          %766 = vmatpush1.msra.mxu0 %v733
          %767 = vmatprep.subr.mxu0 0.0
          %768 = vmatpush2.msra.mxu0 0.0
          %769 = vmatprep.subr.mxu0 0.0
          %770 = vmatpush2.msra.mxu0 0.0
          %771 = vmatprep.subr.mxu0 0.0
          %772 = vmatpush2.msra.mxu0 0.0
          %773 = vmatprep.subr.mxu0 0.0
          %774 = vmatpush2.msra.mxu0 0.0
          %775 = vmatprep.subr.mxu0 0.0
          %776 = vmatpush2.msra.mxu0 0.0
          %777 = vmatprep.subr.mxu0 0.0
          %778 = vmatpush2.msra.mxu0 0.0
          %779 = vmatprep.subr.mxu0 0.0
          %780 = vmatpush2.msra.mxu0 0.0
          %781 = vmatprep.subr.mxu0 0.0
          %782 = vmatpush2.msra.mxu0 0.0
          %783 = vmatprep.subr.mxu0 0.0
          %784 = vmatpush2.msra.mxu0 0.0
          %785 = vmatprep.subr.mxu0 0.0
          %786 = vmatpush2.msra.mxu0 0.0
          %787 = vmatprep.subr.mxu0 0.0
          %788 = vmatpush2.msra.mxu0 0.0
          %789 = vmatprep.subr.mxu0 0.0
          %790 = vmatpush2.msra.mxu0 0.0
          %791 = vmatprep.subr.mxu0 0.0
          %792 = vmatpush2.msra.mxu0 0.0
          %793 = vmatprep.subr.mxu0 0.0
          %794 = vmatpush2.msra.mxu0 0.0
          %795 = vmatprep.subr.mxu0 0.0
          %796 = vmatpush2.msra.mxu0 0.0
          %797 = vmatprep.subr.mxu0 0.0
          %798 = vmatpush2.msra.mxu0 0.0
          %799 = vmatprep.mubr.f32.mxu0 0.0
          %800 = vmatmul.mubr.f32.gmra.mxu0 %v727
          %v801 = vpop.f32.mrf.mxu0
          %v802 = vadd.f32 0.0, %v801
          %v803 = vpop.f32.mrf.mxu0
          %804 = vmatprep.mubr.f32.mxu0 0.0
          %805 = vmatmul.mubr.f32.gmra.mxu0 %v730
          %v806 = vpop.f32.mrf.mxu0
          %v807 = vadd.f32 0.0, %v806
          %v808 = vpop.f32.mrf.mxu0
          %809 = vdwg.mxu0
          %v810 = vadd.f32 %v720, %v802
          %v811 = vadd.f32 %v721, %v807
          %v812 = vld [vmem:[%s631 + $0x2] sm:$0xff]
          %v813 = vld [vmem:[%s631 + $0xa] sm:$0xff]
          %s814 = scalar_lea.vmem %s2, 20
          %v815 = vld [vmem:[%s814] sm:$0x7]
          %v817 = vsel %vm321, %v812, 0
          %v820 = vsel %vm321, %v813, 0
          %v823 = vsel %vm376, %v815, 0
          %825 = vmatprep.subr.mxu0 0.0
          %826 = vmatpush1.msra.mxu0 0.0
          %827 = vmatprep.subr.mxu0 0.0
          %828 = vmatpush1.msra.mxu0 0.0
          %829 = vmatprep.subr.mxu0 0.0
          %830 = vmatpush1.msra.mxu0 0.0
          %831 = vmatprep.subr.mxu0 0.0
          %832 = vmatpush1.msra.mxu0 0.0
          %833 = vmatprep.subr.mxu0 0.0
          %834 = vmatpush1.msra.mxu0 0.0
          %835 = vmatprep.subr.mxu0 0.0
          %836 = vmatpush1.msra.mxu0 0.0
          %837 = vmatprep.subr.mxu0 0.0
          %838 = vmatpush1.msra.mxu0 0.0
          %839 = vmatprep.subr.mxu0 0.0
          %840 = vmatpush1.msra.mxu0 0.0
          %841 = vmatprep.subr.mxu0 0.0
          %842 = vmatpush1.msra.mxu0 0.0
          %843 = vmatprep.subr.mxu0 0.0
          %844 = vmatpush1.msra.mxu0 0.0
          %845 = vmatprep.subr.mxu0 0.0
          %846 = vmatpush1.msra.mxu0 0.0
          %847 = vmatprep.subr.mxu0 0.0
          %848 = vmatpush1.msra.mxu0 0.0
          %849 = vmatprep.subr.mxu0 0.0
          %850 = vmatpush1.msra.mxu0 0.0
          %851 = vmatprep.subr.mxu0 0.0
          %852 = vmatpush1.msra.mxu0 0.0
          %853 = vmatprep.subr.mxu0 0.0
          %854 = vmatpush1.msra.mxu0 0.0
          %855 = vmatprep.subr.mxu0 0.0
          %856 = vmatpush1.msra.mxu0 %v823
          %857 = vmatprep.subr.mxu0 0.0
          %858 = vmatpush2.msra.mxu0 0.0
          %859 = vmatprep.subr.mxu0 0.0
          %860 = vmatpush2.msra.mxu0 0.0
          %861 = vmatprep.subr.mxu0 0.0
          %862 = vmatpush2.msra.mxu0 0.0
          %863 = vmatprep.subr.mxu0 0.0
          %864 = vmatpush2.msra.mxu0 0.0
          %865 = vmatprep.subr.mxu0 0.0
          %866 = vmatpush2.msra.mxu0 0.0
          %867 = vmatprep.subr.mxu0 0.0
          %868 = vmatpush2.msra.mxu0 0.0
          %869 = vmatprep.subr.mxu0 0.0
          %870 = vmatpush2.msra.mxu0 0.0
          %871 = vmatprep.subr.mxu0 0.0
          %872 = vmatpush2.msra.mxu0 0.0
          %873 = vmatprep.subr.mxu0 0.0
          %874 = vmatpush2.msra.mxu0 0.0
          %875 = vmatprep.subr.mxu0 0.0
          %876 = vmatpush2.msra.mxu0 0.0
          %877 = vmatprep.subr.mxu0 0.0
          %878 = vmatpush2.msra.mxu0 0.0
          %879 = vmatprep.subr.mxu0 0.0
          %880 = vmatpush2.msra.mxu0 0.0
          %881 = vmatprep.subr.mxu0 0.0
          %882 = vmatpush2.msra.mxu0 0.0
          %883 = vmatprep.subr.mxu0 0.0
          %884 = vmatpush2.msra.mxu0 0.0
          %885 = vmatprep.subr.mxu0 0.0
          %886 = vmatpush2.msra.mxu0 0.0
          %887 = vmatprep.subr.mxu0 0.0
          %888 = vmatpush2.msra.mxu0 0.0
          %889 = vmatprep.mubr.f32.mxu0 0.0
          %890 = vmatmul.mubr.f32.gmra.mxu0 %v817
          %v891 = vpop.f32.mrf.mxu0
          %v892 = vadd.f32 0.0, %v891
          %v893 = vpop.f32.mrf.mxu0
          %894 = vmatprep.mubr.f32.mxu0 0.0
          %895 = vmatmul.mubr.f32.gmra.mxu0 %v820
          %v896 = vpop.f32.mrf.mxu0
          %v897 = vadd.f32 0.0, %v896
          %v898 = vpop.f32.mrf.mxu0
          %899 = vdwg.mxu0
          %v900 = vadd.f32 %v810, %v892
          %v901 = vadd.f32 %v811, %v897
          %s902 = sadd.s32 %s360, 2
          %s903 = smul.u32 %s902, 24
          %s904 = scalar_lea.vmem [#allocation2], %s903
          %v905 = vld [vmem:[%s904] sm:$0xff]
          %v906 = vld [vmem:[%s904 + $0x8] sm:$0xff]
          %s907 = scalar_lea.vmem %s2, 24
          %v908 = vld [vmem:[%s907] sm:$0x7]
          %v910 = vsel %vm321, %v905, 0
          %v913 = vsel %vm321, %v906, 0
          %v916 = vsel %vm376, %v908, 0
          %918 = vmatprep.subr.mxu0 0.0
          %919 = vmatpush1.msra.mxu0 0.0
          %920 = vmatprep.subr.mxu0 0.0
          %921 = vmatpush1.msra.mxu0 0.0
          %922 = vmatprep.subr.mxu0 0.0
          %923 = vmatpush1.msra.mxu0 0.0
          %924 = vmatprep.subr.mxu0 0.0
          %925 = vmatpush1.msra.mxu0 0.0
          %926 = vmatprep.subr.mxu0 0.0
          %927 = vmatpush1.msra.mxu0 0.0
          %928 = vmatprep.subr.mxu0 0.0
          %929 = vmatpush1.msra.mxu0 0.0
          %930 = vmatprep.subr.mxu0 0.0
          %931 = vmatpush1.msra.mxu0 0.0
          %932 = vmatprep.subr.mxu0 0.0
          %933 = vmatpush1.msra.mxu0 0.0
          %934 = vmatprep.subr.mxu0 0.0
          %935 = vmatpush1.msra.mxu0 0.0
          %936 = vmatprep.subr.mxu0 0.0
          %937 = vmatpush1.msra.mxu0 0.0
          %938 = vmatprep.subr.mxu0 0.0
          %939 = vmatpush1.msra.mxu0 0.0
          %940 = vmatprep.subr.mxu0 0.0
          %941 = vmatpush1.msra.mxu0 0.0
          %942 = vmatprep.subr.mxu0 0.0
          %943 = vmatpush1.msra.mxu0 0.0
          %944 = vmatprep.subr.mxu0 0.0
          %945 = vmatpush1.msra.mxu0 0.0
          %946 = vmatprep.subr.mxu0 0.0
          %947 = vmatpush1.msra.mxu0 0.0
          %948 = vmatprep.subr.mxu0 0.0
          %949 = vmatpush1.msra.mxu0 %v916
          %950 = vmatprep.subr.mxu0 0.0
          %951 = vmatpush2.msra.mxu0 0.0
          %952 = vmatprep.subr.mxu0 0.0
          %953 = vmatpush2.msra.mxu0 0.0
          %954 = vmatprep.subr.mxu0 0.0
          %955 = vmatpush2.msra.mxu0 0.0
          %956 = vmatprep.subr.mxu0 0.0
          %957 = vmatpush2.msra.mxu0 0.0
          %958 = vmatprep.subr.mxu0 0.0
          %959 = vmatpush2.msra.mxu0 0.0
          %960 = vmatprep.subr.mxu0 0.0
          %961 = vmatpush2.msra.mxu0 0.0
          %962 = vmatprep.subr.mxu0 0.0
          %963 = vmatpush2.msra.mxu0 0.0
          %964 = vmatprep.subr.mxu0 0.0
          %965 = vmatpush2.msra.mxu0 0.0
          %966 = vmatprep.subr.mxu0 0.0
          %967 = vmatpush2.msra.mxu0 0.0
          %968 = vmatprep.subr.mxu0 0.0
          %969 = vmatpush2.msra.mxu0 0.0
          %970 = vmatprep.subr.mxu0 0.0
          %971 = vmatpush2.msra.mxu0 0.0
          %972 = vmatprep.subr.mxu0 0.0
          %973 = vmatpush2.msra.mxu0 0.0
          %974 = vmatprep.subr.mxu0 0.0
          %975 = vmatpush2.msra.mxu0 0.0
          %976 = vmatprep.subr.mxu0 0.0
          %977 = vmatpush2.msra.mxu0 0.0
          %978 = vmatprep.subr.mxu0 0.0
          %979 = vmatpush2.msra.mxu0 0.0
          %980 = vmatprep.subr.mxu0 0.0
          %981 = vmatpush2.msra.mxu0 0.0
          %982 = vmatprep.mubr.f32.mxu0 0.0
          %983 = vmatmul.mubr.f32.gmra.mxu0 %v910
          %v984 = vpop.f32.mrf.mxu0
          %v985 = vadd.f32 0.0, %v984
          %v986 = vpop.f32.mrf.mxu0
          %987 = vmatprep.mubr.f32.mxu0 0.0
          %988 = vmatmul.mubr.f32.gmra.mxu0 %v913
          %v989 = vpop.f32.mrf.mxu0
          %v990 = vadd.f32 0.0, %v989
          %v991 = vpop.f32.mrf.mxu0
          %992 = vdwg.mxu0
          %v993 = vadd.f32 %v900, %v985
          %v994 = vadd.f32 %v901, %v990
          %v995 = vld [vmem:[%s904 + $0x1] sm:$0xff]
          %v996 = vld [vmem:[%s904 + $0x9] sm:$0xff]
          %s997 = scalar_lea.vmem %s2, 28
          %v998 = vld [vmem:[%s997] sm:$0x7]
          %v1000 = vsel %vm321, %v995, 0
          %v1003 = vsel %vm321, %v996, 0
          %v1006 = vsel %vm376, %v998, 0
          %1008 = vmatprep.subr.mxu0 0.0
          %1009 = vmatpush1.msra.mxu0 0.0
          %1010 = vmatprep.subr.mxu0 0.0
          %1011 = vmatpush1.msra.mxu0 0.0
          %1012 = vmatprep.subr.mxu0 0.0
          %1013 = vmatpush1.msra.mxu0 0.0
          %1014 = vmatprep.subr.mxu0 0.0
          %1015 = vmatpush1.msra.mxu0 0.0
          %1016 = vmatprep.subr.mxu0 0.0
          %1017 = vmatpush1.msra.mxu0 0.0
          %1018 = vmatprep.subr.mxu0 0.0
          %1019 = vmatpush1.msra.mxu0 0.0
          %1020 = vmatprep.subr.mxu0 0.0
          %1021 = vmatpush1.msra.mxu0 0.0
          %1022 = vmatprep.subr.mxu0 0.0
          %1023 = vmatpush1.msra.mxu0 0.0
          %1024 = vmatprep.subr.mxu0 0.0
          %1025 = vmatpush1.msra.mxu0 0.0
          %1026 = vmatprep.subr.mxu0 0.0
          %1027 = vmatpush1.msra.mxu0 0.0
          %1028 = vmatprep.subr.mxu0 0.0
          %1029 = vmatpush1.msra.mxu0 0.0
          %1030 = vmatprep.subr.mxu0 0.0
          %1031 = vmatpush1.msra.mxu0 0.0
          %1032 = vmatprep.subr.mxu0 0.0
          %1033 = vmatpush1.msra.mxu0 0.0
          %1034 = vmatprep.subr.mxu0 0.0
          %1035 = vmatpush1.msra.mxu0 0.0
          %1036 = vmatprep.subr.mxu0 0.0
          %1037 = vmatpush1.msra.mxu0 0.0
          %1038 = vmatprep.subr.mxu0 0.0
          %1039 = vmatpush1.msra.mxu0 %v1006
          %1040 = vmatprep.subr.mxu0 0.0
          %1041 = vmatpush2.msra.mxu0 0.0
          %1042 = vmatprep.subr.mxu0 0.0
          %1043 = vmatpush2.msra.mxu0 0.0
          %1044 = vmatprep.subr.mxu0 0.0
          %1045 = vmatpush2.msra.mxu0 0.0
          %1046 = vmatprep.subr.mxu0 0.0
          %1047 = vmatpush2.msra.mxu0 0.0
          %1048 = vmatprep.subr.mxu0 0.0
          %1049 = vmatpush2.msra.mxu0 0.0
          %1050 = vmatprep.subr.mxu0 0.0
          %1051 = vmatpush2.msra.mxu0 0.0
          %1052 = vmatprep.subr.mxu0 0.0
          %1053 = vmatpush2.msra.mxu0 0.0
          %1054 = vmatprep.subr.mxu0 0.0
          %1055 = vmatpush2.msra.mxu0 0.0
          %1056 = vmatprep.subr.mxu0 0.0
          %1057 = vmatpush2.msra.mxu0 0.0
          %1058 = vmatprep.subr.mxu0 0.0
          %1059 = vmatpush2.msra.mxu0 0.0
          %1060 = vmatprep.subr.mxu0 0.0
          %1061 = vmatpush2.msra.mxu0 0.0
          %1062 = vmatprep.subr.mxu0 0.0
          %1063 = vmatpush2.msra.mxu0 0.0
          %1064 = vmatprep.subr.mxu0 0.0
          %1065 = vmatpush2.msra.mxu0 0.0
          %1066 = vmatprep.subr.mxu0 0.0
          %1067 = vmatpush2.msra.mxu0 0.0
          %1068 = vmatprep.subr.mxu0 0.0
          %1069 = vmatpush2.msra.mxu0 0.0
          %1070 = vmatprep.subr.mxu0 0.0
          %1071 = vmatpush2.msra.mxu0 0.0
          %1072 = vmatprep.mubr.f32.mxu0 0.0
          %1073 = vmatmul.mubr.f32.gmra.mxu0 %v1000
          %v1074 = vpop.f32.mrf.mxu0
          %v1075 = vadd.f32 0.0, %v1074
          %v1076 = vpop.f32.mrf.mxu0
          %1077 = vmatprep.mubr.f32.mxu0 0.0
          %1078 = vmatmul.mubr.f32.gmra.mxu0 %v1003
          %v1079 = vpop.f32.mrf.mxu0
          %v1080 = vadd.f32 0.0, %v1079
          %v1081 = vpop.f32.mrf.mxu0
          %1082 = vdwg.mxu0
          %v1083 = vadd.f32 %v993, %v1075
          %v1084 = vadd.f32 %v994, %v1080
          %v1085 = vld [vmem:[%s904 + $0x2] sm:$0xff]
          %v1086 = vld [vmem:[%s904 + $0xa] sm:$0xff]
          %s1087 = scalar_lea.vmem %s2, 32
          %v1088 = vld [vmem:[%s1087] sm:$0x7]
          %v1090 = vsel %vm321, %v1085, 0
          %v1093 = vsel %vm321, %v1086, 0
          %v1096 = vsel %vm376, %v1088, 0
          %1098 = vmatprep.subr.mxu0 0.0
          %1099 = vmatpush1.msra.mxu0 0.0
          %1100 = vmatprep.subr.mxu0 0.0
          %1101 = vmatpush1.msra.mxu0 0.0
          %1102 = vmatprep.subr.mxu0 0.0
          %1103 = vmatpush1.msra.mxu0 0.0
          %1104 = vmatprep.subr.mxu0 0.0
          %1105 = vmatpush1.msra.mxu0 0.0
          %1106 = vmatprep.subr.mxu0 0.0
          %1107 = vmatpush1.msra.mxu0 0.0
          %1108 = vmatprep.subr.mxu0 0.0
          %1109 = vmatpush1.msra.mxu0 0.0
          %1110 = vmatprep.subr.mxu0 0.0
          %1111 = vmatpush1.msra.mxu0 0.0
          %1112 = vmatprep.subr.mxu0 0.0
          %1113 = vmatpush1.msra.mxu0 0.0
          %1114 = vmatprep.subr.mxu0 0.0
          %1115 = vmatpush1.msra.mxu0 0.0
          %1116 = vmatprep.subr.mxu0 0.0
          %1117 = vmatpush1.msra.mxu0 0.0
          %1118 = vmatprep.subr.mxu0 0.0
          %1119 = vmatpush1.msra.mxu0 0.0
          %1120 = vmatprep.subr.mxu0 0.0
          %1121 = vmatpush1.msra.mxu0 0.0
          %1122 = vmatprep.subr.mxu0 0.0
          %1123 = vmatpush1.msra.mxu0 0.0
          %1124 = vmatprep.subr.mxu0 0.0
          %1125 = vmatpush1.msra.mxu0 0.0
          %1126 = vmatprep.subr.mxu0 0.0
          %1127 = vmatpush1.msra.mxu0 0.0
          %1128 = vmatprep.subr.mxu0 0.0
          %1129 = vmatpush1.msra.mxu0 %v1096
          %1130 = vmatprep.subr.mxu0 0.0
          %1131 = vmatpush2.msra.mxu0 0.0
          %1132 = vmatprep.subr.mxu0 0.0
          %1133 = vmatpush2.msra.mxu0 0.0
          %1134 = vmatprep.subr.mxu0 0.0
          %1135 = vmatpush2.msra.mxu0 0.0
          %1136 = vmatprep.subr.mxu0 0.0
          %1137 = vmatpush2.msra.mxu0 0.0
          %1138 = vmatprep.subr.mxu0 0.0
          %1139 = vmatpush2.msra.mxu0 0.0
          %1140 = vmatprep.subr.mxu0 0.0
          %1141 = vmatpush2.msra.mxu0 0.0
          %1142 = vmatprep.subr.mxu0 0.0
          %1143 = vmatpush2.msra.mxu0 0.0
          %1144 = vmatprep.subr.mxu0 0.0
          %1145 = vmatpush2.msra.mxu0 0.0
          %1146 = vmatprep.subr.mxu0 0.0
          %1147 = vmatpush2.msra.mxu0 0.0
          %1148 = vmatprep.subr.mxu0 0.0
          %1149 = vmatpush2.msra.mxu0 0.0
          %1150 = vmatprep.subr.mxu0 0.0
          %1151 = vmatpush2.msra.mxu0 0.0
          %1152 = vmatprep.subr.mxu0 0.0
          %1153 = vmatpush2.msra.mxu0 0.0
          %1154 = vmatprep.subr.mxu0 0.0
          %1155 = vmatpush2.msra.mxu0 0.0
          %1156 = vmatprep.subr.mxu0 0.0
          %1157 = vmatpush2.msra.mxu0 0.0
          %1158 = vmatprep.subr.mxu0 0.0
          %1159 = vmatpush2.msra.mxu0 0.0
          %1160 = vmatprep.subr.mxu0 0.0
          %1161 = vmatpush2.msra.mxu0 0.0
          %1162 = vmatprep.mubr.f32.mxu0 0.0
          %1163 = vmatmul.mubr.f32.gmra.mxu0 %v1090
          %v1164 = vpop.f32.mrf.mxu0
          %v1165 = vadd.f32 0.0, %v1164
          %v1166 = vpop.f32.mrf.mxu0
          %1167 = vmatprep.mubr.f32.mxu0 0.0
          %1168 = vmatmul.mubr.f32.gmra.mxu0 %v1093
          %v1169 = vpop.f32.mrf.mxu0
          %v1170 = vadd.f32 0.0, %v1169
          %v1171 = vpop.f32.mrf.mxu0
          %1172 = vdwg.mxu0
          %v1173 = vadd.f32 %v1083, %v1165
          %v1174 = vadd.f32 %v1084, %v1170
          %v1175 = vld [vmem:[%s3] sm:$0x1]
          %v1177 = vlaneseq
          %v1178 = vshrl.u32 %v1177, 7
          %v1179 = vsub.s32 0, %v1178
          %v1180 = vrot.slane %v1175, %v1179
          %v1182 = vadd.f32 %v1173, %v1180
          %v1183 = vadd.f32 %v1174, %v1180
          %v1184 = vmax.f32 %v1182, 0.0
          %v1185 = vmax.f32 %v1183, 0.0
          %vm1186 = vcmask 130048
          %v1188 = vsel %vm1186, %v353, 0
          %1190 = vmatprep.subr.mxu0 0.0
          %1191 = vmatpush1.msra.mxu0 0.0
          %1192 = vmatprep.subr.mxu0 0.0
          %1193 = vmatpush1.msra.mxu0 0.0
          %1194 = vmatprep.subr.mxu0 0.0
          %1195 = vmatpush1.msra.mxu0 0.0
          %1196 = vmatprep.subr.mxu0 0.0
          %1197 = vmatpush1.msra.mxu0 0.0
          %1198 = vmatprep.subr.mxu0 0.0
          %1199 = vmatpush1.msra.mxu0 0.0
          %1200 = vmatprep.subr.mxu0 0.0
          %1201 = vmatpush1.msra.mxu0 0.0
          %1202 = vmatprep.subr.mxu0 0.0
          %1203 = vmatpush1.msra.mxu0 0.0
          %1204 = vmatprep.subr.mxu0 0.0
          %1205 = vmatpush1.msra.mxu0 0.0
          %1206 = vmatprep.subr.mxu0 0.0
          %1207 = vmatpush1.msra.mxu0 0.0
          %1208 = vmatprep.subr.mxu0 0.0
          %1209 = vmatpush1.msra.mxu0 0.0
          %1210 = vmatprep.subr.mxu0 0.0
          %1211 = vmatpush1.msra.mxu0 0.0
          %1212 = vmatprep.subr.mxu0 0.0
          %1213 = vmatpush1.msra.mxu0 0.0
          %1214 = vmatprep.subr.mxu0 0.0
          %1215 = vmatpush1.msra.mxu0 0.0
          %1216 = vmatprep.subr.mxu0 0.0
          %1217 = vmatpush1.msra.mxu0 0.0
          %1218 = vmatprep.subr.mxu0 0.0
          %1219 = vmatpush1.msra.mxu0 %v1185
          %1220 = vmatprep.subr.mxu0 0.0
          %1221 = vmatpush1.msra.mxu0 %v1184
          %1222 = vmatprep.subr.mxu0 0.0
          %1223 = vmatpush2.msra.mxu0 0.0
          %1224 = vmatprep.subr.mxu0 0.0
          %1225 = vmatpush2.msra.mxu0 0.0
          %1226 = vmatprep.subr.mxu0 0.0
          %1227 = vmatpush2.msra.mxu0 0.0
          %1228 = vmatprep.subr.mxu0 0.0
          %1229 = vmatpush2.msra.mxu0 0.0
          %1230 = vmatprep.subr.mxu0 0.0
          %1231 = vmatpush2.msra.mxu0 0.0
          %1232 = vmatprep.subr.mxu0 0.0
          %1233 = vmatpush2.msra.mxu0 0.0
          %1234 = vmatprep.subr.mxu0 0.0
          %1235 = vmatpush2.msra.mxu0 0.0
          %1236 = vmatprep.subr.mxu0 0.0
          %1237 = vmatpush2.msra.mxu0 0.0
          %1238 = vmatprep.subr.mxu0 0.0
          %1239 = vmatpush2.msra.mxu0 0.0
          %1240 = vmatprep.subr.mxu0 0.0
          %1241 = vmatpush2.msra.mxu0 0.0
          %1242 = vmatprep.subr.mxu0 0.0
          %1243 = vmatpush2.msra.mxu0 0.0
          %1244 = vmatprep.subr.mxu0 0.0
          %1245 = vmatpush2.msra.mxu0 0.0
          %1246 = vmatprep.subr.mxu0 0.0
          %1247 = vmatpush2.msra.mxu0 0.0
          %1248 = vmatprep.subr.mxu0 0.0
          %1249 = vmatpush2.msra.mxu0 0.0
          %1250 = vmatprep.subr.mxu0 0.0
          %1251 = vmatpush2.msra.mxu0 0.0
          %1252 = vmatprep.subr.mxu0 0.0
          %1253 = vmatpush2.msra.mxu0 0.0
          %1254 = vmatprep.mubr.f32.mxu0 0.0
          %1255 = vmatmul.mubr.f32.gmra.mxu0 %v1188
          %v1256 = vpop.f32.mrf.mxu0
          %v1257 = vadd.f32 0.0, %v1256
          %v1258 = vpop.f32.mrf.mxu0
          %1259 = vdwg.mxu0
          %s1260 = smul.u32 %s355, 8
          %s1261 = scalar_lea.vmem %s262, %s1260 [#allocation3]
          %vm1262 = vcmask 64512
          %1263 = vst.msk [vmem:[%s1261] sm:$0xff] %vm1262, %v1257
        $region48: #{tpu_custom_call.1} parent=35 // loop_footer
          %s359 = sadd.s32 1, %s355
        $region49: #{tpu_custom_call.1} parent=35 // loop_footer_branch
          %354 = sbr.rel target = $region45
        $region50: #{tpu_custom_call.1} parent=35 // loop_exit
          _
        %s1264 = sand.u32 %s146, 1
        %s1265 = scalar_lea.sflag [#allocation4], %s1264
        %s1266 = sand.u32 %s146, 1
        %s1267 = smul.addr %s1266, 32
        %s1268 = scalar_lea.vmem [#allocation3], %s1267
        // Predicated region
        $region51: #{tpu_custom_call.1} parent=35 // pred_check
          %p1269 = pneg %p156
        $region52: #{tpu_custom_call.1} parent=35 // pred_check_branch
          %1271 = sbr.rel (%p1269) target = $region54
        $region53: #{tpu_custom_call.1} parent=35 // pred_region
          %s1272 = smul.u32 4, %s23
          %s1274 = ssub.s32 512, 512
          %1275 = vsyncadd %s1265, %s1274
          %s1276 = smul.addr %s22, 8
          %s1277 = sadd.s32 %s1272, %s1276
          %s1278 = smul.addr %s1277, 128
          %s1279 = scalar_lea.hbm %s4, %s1278
          %s1280 = sshll.u32 %s1268, 4
          %s1281 = int_to_ptr.vmem [resolvable:$true] %s1280
          %1286 = dma.vmem_to_hbm [thread:$0]  %s1281, 512, %s1279, %s1265, 128, 128, 8
        $region54: #{tpu_custom_call.1} parent=35 // pred_fallthru
          _
      $region36: #{tpu_custom_call.1} parent=5 // pred_fallthru
        _
      %p1287 = scmp.le.s32.totalorder 2, %s13
      // Predicated region
      $region55: #{tpu_custom_call.1} parent=5 // pred_check
        %p1288 = pneg %p1287
      $region56: #{tpu_custom_call.1} parent=5 // pred_check_branch
        %1290 = sbr.rel (%p1288) target = $region58
      $region57: #{tpu_custom_call.1} parent=5 // pred_region
        %s1291 = ssub.s32 %s13, 2
        // Predicated region
        $region59: #{tpu_custom_call.1} parent=57 // pred_check
          %p1292 = pneg %p162
        $region60: #{tpu_custom_call.1} parent=57 // pred_check_branch
          %1294 = sbr.rel (%p1292) target = $region62
        $region61: #{tpu_custom_call.1} parent=57 // pred_region
          %s1295 = sand.u32 %s147, 1
          %s1296 = scalar_lea.sflag [#allocation4], %s1295
          %s1297 = sand.u32 %s147, 1
          %s1298 = smul.addr %s1297, 32
          %s1299 = scalar_lea.vmem [#allocation3], %s1298
          %1300 = dma.done %s1296, 512
        $region62: #{tpu_custom_call.1} parent=57 // pred_fallthru
          _
      $region58: #{tpu_custom_call.1} parent=5 // pred_fallthru
        _
    $region6: #{tpu_custom_call.1} parent=1 // loop_footer
      %s17 = sadd.s32 1, %s13
    $region7: #{tpu_custom_call.1} parent=1 // loop_footer_branch
      %12 = sbr.rel target = $region3
    $region8: #{tpu_custom_call.1} parent=1 // loop_exit
      _
    %1301 = vsyncpa [#allocation4], 1
    %s1302 = scalar_lea.sflag [#allocation4], 1
    %1303 = vsyncpa %s1302, 1

</llo_original>
